<compile_context>
chip_gen: v7x
topology: tpu7x:2x2x1
jax: 0.10.0
libtpu: 0.0.40
codegen_flags: <defaults>
</compile_context>

<pallas_src>
import math

import jax
import jax.numpy as jnp
from jax.experimental import pallas as pl
from jax.experimental.pallas import tpu as pltpu

HDIM = 32        # hidden dim
NHEADS = 4       # attention heads
S = 8            # in-neighbours per node (dense mailbox size == sublane count)
N = 128          # number of nodes in the demo
NUMRELS = 3      # number of relations
LANES = 128      # TPU lane width; PACK = LANES // HDIM nodes per packed row
EPS = 1e-5
FFN_GATE_BIAS = -2.5

# indices into the stacked (NWBLK, 128, 128) block-diagonal weight array
W1H, W1R, W2A, W2R, WQ, WK, UW1, UW2A, UW2R, SEG, HEAD = range(11)
NWBLK = 11


def _celu(x):
    # CELU with alpha = 1
    return jnp.where(x > 0, x, jnp.exp(jnp.minimum(x, 0.0)) - 1.0)


# --------------------------------- kernel ---------------------------------

def _make_kernel(hdim):
    inv_cat = 1.0 / (2.0 * hdim)   # msg-FFN LayerNorm over the 2*hdim concat
    inv_h = 1.0 / hdim             # update-FFN LayerNorm over hdim

    def kernel(h_ref, hs_ref, rel_ref, vecs_ref, wblk_ref, out_ref):
        """One node tile, lane-packed 4 nodes / 4 edges per 128-lane row."""
        f32 = jnp.float32
        tn4, lanes = h_ref.shape           # packed node rows, 128 lanes
        re = hs_ref.shape[0]               # packed edge rows = tn4 * S
        s = re // tn4                      # slots (in-neighbours) per node

        vec = vecs_ref[...]                # (16, 128) lane-tiled bias/LN rows
        m_ln_g_h, m_ln_g_r = vec[0:1], vec[1:2]
        m_ln_b_h, m_ln_b_r = vec[2:3], vec[3:4]
        m_b1, m_b2a, m_b2r = vec[4:5], vec[5:6], vec[6:7]
        u_ln_g, u_ln_b = vec[7:8], vec[8:9]
        u_b1, u_b2a, u_b2r = vec[9:10], vec[10:11], vec[11:12]

        hs = hs_ref[...].astype(f32)       # (re, 128)  bf16 mailbox -> f32
        rel = rel_ref[...].astype(f32)

        # ---- message FFN on the *virtual* concat [hs ; rel] ----
        # Per-edge (32-lane segment) LN stats via the block-diag ones mask on
        # the MXU (segmented sum + re-broadcast); fc1 uses the row-split W1, so
        # the concat is never materialised and packed edges never couple.
        mu = jnp.dot(hs + rel, wblk_ref[SEG], preferred_element_type=f32) * inv_cat
        d_hs, d_rel = hs - mu, rel - mu
        var = jnp.dot(d_hs * d_hs + d_rel * d_rel, wblk_ref[SEG],
                      preferred_element_type=f32) * inv_cat
        inv_std = jax.lax.rsqrt(var + EPS)
        n_hs = d_hs * inv_std * m_ln_g_h + m_ln_b_h
        n_rel = d_rel * inv_std * m_ln_g_r + m_ln_b_r
        z = (jnp.dot(n_hs, wblk_ref[W1H], preferred_element_type=f32) +
             jnp.dot(n_rel, wblk_ref[W1R], preferred_element_type=f32) + m_b1)
        z = _celu(z)
        ga = jnp.dot(z, wblk_ref[W2A], preferred_element_type=f32) + m_b2a
        gr = jnp.dot(z, wblk_ref[W2R], preferred_element_type=f32) + m_b2r
        msg = hs + jax.nn.sigmoid(gr) * ga                       # (re, 128)

        # ---- multi-head attention reduce (q = h, k = v = msg) ----
        # Heads AND the 4-node lane pack are fused: the block-diag ones/sqrt(dh)
        # mask sums each head's 8 lanes and re-broadcasts the score onto them.
        hq = h_ref[...]                                          # (tn4, 128)
        q = jnp.dot(hq, wblk_ref[WQ], preferred_element_type=f32)
        k = jnp.dot(msg, wblk_ref[WK], preferred_element_type=f32)

        k3 = k.reshape(tn4, s, lanes)    # slot-major pack -> layout-preserving
        v3 = msg.reshape(tn4, s, lanes)  # (groups, S=8 sublanes, 128 lanes)
        prod = q[:, None, :] * k3
        sc = jnp.dot(prod.reshape(re, lanes), wblk_ref[HEAD],
                     preferred_element_type=f32).reshape(tn4, s, lanes)
        sc = sc - jnp.max(sc, axis=1, keepdims=True)             # per-head max over S
        e = jnp.exp(sc)
        denom = jnp.sum(e, axis=1, keepdims=True)
        alphas = e * pl.reciprocal(denom, approx=True)           # EUP divide
        red = jnp.sum(alphas * v3, axis=1)                       # (tn4, 128)

        # ---- node update:  h_new = h + GatedFFN(red) ----
        mu2 = jnp.dot(red, wblk_ref[SEG], preferred_element_type=f32) * inv_h
        d2 = red - mu2
        var2 = jnp.dot(d2 * d2, wblk_ref[SEG], preferred_element_type=f32) * inv_h
        n2 = d2 * jax.lax.rsqrt(var2 + EPS) * u_ln_g + u_ln_b
        z2 = _celu(jnp.dot(n2, wblk_ref[UW1], preferred_element_type=f32) + u_b1)
        ua = jnp.dot(z2, wblk_ref[UW2A], preferred_element_type=f32) + u_b2a
        ur = jnp.dot(z2, wblk_ref[UW2R], preferred_element_type=f32) + u_b2r
        out_ref[...] = hq + jax.nn.sigmoid(ur) * ua              # lane-dense store

    return kernel


# --------------------------------- wrapper ---------------------------------

def _pack_params(p, hdim, nheads, pack):
    """Pack the small parameters into 2 arrays: lane-tiled rows + block-diag weights."""
    f32 = jnp.float32
    dh = hdim // nheads
    lanes = pack * hdim

    def lane_tile(v):                         # (1, hdim) -> (1, pack*hdim)
        return jnp.tile(v.reshape(1, hdim).astype(f32), (1, pack))

    rows = [
        lane_tile(p["m_ln_g"][:, :hdim]), lane_tile(p["m_ln_g"][:, hdim:]),
        lane_tile(p["m_ln_b"][:, :hdim]), lane_tile(p["m_ln_b"][:, hdim:]),
        lane_tile(p["m_b1"]),
        lane_tile(p["m_b2"][:, :hdim]), lane_tile(p["m_b2"][:, hdim:]),
        lane_tile(p["u_ln_g"]), lane_tile(p["u_ln_b"]),
        lane_tile(p["u_b1"]),
        lane_tile(p["u_b2"][:, :hdim]), lane_tile(p["u_b2"][:, hdim:]),
    ]
    vecs = jnp.concatenate(
        rows + [jnp.zeros((16 - len(rows), lanes), f32)], axis=0)   # (16, 128)

    eye_p = jnp.eye(pack, dtype=f32)

    def bdiag(w):                             # (hdim, hdim) -> block-diag (128, 128)
        return jnp.kron(eye_p, w.astype(f32))

    segmask = jnp.kron(eye_p, jnp.ones((hdim, hdim), f32))          # per-node sum
    headmask = jnp.kron(jnp.eye(pack * nheads, dtype=f32),
                        jnp.ones((dh, dh), f32)) / math.sqrt(float(dh))

    wblk = jnp.stack([                       # order must match W1H..HEAD indices
        bdiag(p["m_w1"][:hdim, :]), bdiag(p["m_w1"][hdim:, :]),
        bdiag(p["m_w2"][:, :hdim]), bdiag(p["m_w2"][:, hdim:]),
        bdiag(p["wq"]), bdiag(p["wk"]),
        bdiag(p["u_w1"]),
        bdiag(p["u_w2"][:, :hdim]), bdiag(p["u_w2"][:, hdim:]),
        segmask, headmask,
    ], axis=0)                                                      # (11, 128, 128)
    return vecs, wblk


def _choose_tile(n, tn_req, pack):
    """Node tile (multiple of 8*pack) that keeps >= min(8, available) grid steps."""
    step = 8 * pack
    n_pad0 = pl.cdiv(n, step) * step
    tn = max(step, (min(tn_req, n_pad0) // step) * step)
    # v7x: 2 TensorCores share the grid; keep enough parallel steps for a real
    # pipeline per core.  v6e/v5e users chasing bigger tiles can raise tn_req.
    target = min(8, n_pad0 // step)
    while tn > step and pl.cdiv(n_pad0, tn) < target:
        tn -= step
    return tn


def lrtm_forward(h, src_idx, rel_ids, p, *, tn=512):
    n, hdim = h.shape
    s = src_idx.shape[1]
    assert LANES % hdim == 0 and hdim % NHEADS == 0
    pack = LANES // hdim                      # nodes (edges) per 128-lane row

    tn = _choose_tile(n, tn, pack)
    n_pad = pl.cdiv(n, tn) * tn

    h_pad = h if n_pad == n else jnp.pad(h, ((0, n_pad - n), (0, 0)))
    src_pad = src_idx if n_pad == n else jnp.pad(src_idx, ((0, n_pad - n), (0, 0)))
    rid_pad = rel_ids if n_pad == n else jnp.pad(rel_ids, ((0, n_pad - n), (0, 0)))

    # graph glue (XLA): gather the hs mailbox and the relation embeddings, then
    # lane-pack `pack` nodes/edges per 128-lane row.  Edges are packed
    # slot-major inside each 4-node group so the kernel sees a (groups, S, 128)
    # view without any lane shuffling.
    hs = jnp.take(h_pad, src_pad.reshape(-1), axis=0).reshape(n_pad, s, hdim)
    rel = jnp.take(p["relvectors"][:, :hdim], rid_pad.reshape(-1),
                   axis=0).reshape(n_pad, s, hdim)

    def pack_edges(x):
        x = x.reshape(n_pad // pack, pack, s, hdim)
        return x.transpose(0, 2, 1, 3).reshape(n_pad * s // pack, LANES)

    hs_p = pack_edges(hs).astype(jnp.bfloat16)     # dominant stream -> bf16
    rel_p = pack_edges(rel).astype(jnp.bfloat16)
    h_p = h_pad.reshape(n_pad // pack, LANES).astype(jnp.float32)

    vecs, wblk = _pack_params(p, hdim, NHEADS, pack)

    tn4 = tn // pack              # packed node rows per tile (multiple of 8)
    te = tn * s // pack           # packed edge rows per tile (multiple of 16)

    out = pl.pallas_call(
        _make_kernel(hdim),
        out_shape=jax.ShapeDtypeStruct((n_pad // pack, LANES), jnp.float32),
        grid=(n_pad // tn,),
        in_specs=[
            pl.BlockSpec((tn4, LANES), lambda i: (i, 0)),    # h (queries/residual)
            pl.BlockSpec((te, LANES), lambda i: (i, 0)),     # hs mailbox (bf16)
            pl.BlockSpec((te, LANES), lambda i: (i, 0)),     # rel mailbox (bf16)
            pl.BlockSpec(vecs.shape, lambda i: (0, 0)),      # lane-tiled bias/LN rows
            pl.BlockSpec(wblk.shape, lambda i: (0, 0, 0)),   # block-diag weights
        ],
        out_specs=pl.BlockSpec((tn4, LANES), lambda i: (i, 0)),
        compiler_params=pltpu.CompilerParams(
            dimension_semantics=("parallel",),
            vmem_limit_bytes=32 * 1024 * 1024),
    )(h_p, hs_p, rel_p, vecs, wblk)

    # un-pack the lane-dense (n_pad/4, 128) slab back to (n, hdim)
    return out.reshape(n_pad, hdim)[:n]


# ----------------------------- pure-JAX reference -----------------------------

def lrtm_reference(h, src_idx, rel_ids, p):
    hdim = h.shape[1]
    hp = jax.lax.Precision.HIGHEST

    def ffn_gated(x, lg, lb, w1, b1, w2, b2):
        mu = jnp.mean(x, axis=-1, keepdims=True)
        var = jnp.mean((x - mu) ** 2, axis=-1, keepdims=True)
        z = (x - mu) * jax.lax.rsqrt(var + EPS) * lg + lb
        z = jnp.dot(z, w1, precision=hp) + b1
        z = jnp.where(z > 0, z, jnp.exp(jnp.minimum(z, 0.0)) - 1.0)
        z = jnp.dot(z, w2, precision=hp) + b2
        a, r = z[..., :hdim], z[..., hdim:]
        return jax.nn.sigmoid(r) * a

    hs = h[src_idx]
    rel = p["relvectors"][rel_ids][:, :, :hdim]
    x = jnp.concatenate([hs, rel], -1)
    msg = hs + ffn_gated(x, p["m_ln_g"], p["m_ln_b"], p["m_w1"], p["m_b1"],
                         p["m_w2"], p["m_b2"])

    n, s_, _ = msg.shape
    dh = hdim // NHEADS
    q = jnp.dot(h, p["wq"], precision=hp).reshape(n, NHEADS, dh)
    k = jnp.dot(msg, p["wk"], precision=hp).reshape(n, s_, NHEADS, dh).transpose(0, 2, 1, 3)
    v = msg.reshape(n, s_, NHEADS, dh).transpose(0, 2, 1, 3)
    w = jnp.einsum("bhd,bhsd->bhs", q, k, precision=hp) / jnp.sqrt(dh)
    a = jax.nn.softmax(w, -1)
    red = jnp.einsum("bhs,bhsd->bhd", a, v, precision=hp).reshape(n, hdim)

    upd = ffn_gated(red, p["u_ln_g"], p["u_ln_b"], p["u_w1"], p["u_b1"],
                    p["u_w2"], p["u_b2"])
    return h + upd


# ----------------------------- parameter init -----------------------------

def init_params(key, hdim, numrels):
    ks = jax.random.split(key, 12)

    def lin_w(k, fin, fout):
        b = 1.0 / jnp.sqrt(fin)
        return jax.random.uniform(k, (fin, fout), jnp.float32, -b, b)

    def lin_b(k, fin, fout):
        b = 1.0 / jnp.sqrt(fin)
        return jax.random.uniform(k, (1, fout), jnp.float32, -b, b)

    # relvectors: [kaiming-ish random | ones | zeros]  (only first hdim is used)
    rel0 = jax.random.uniform(ks[0], (numrels, hdim), jnp.float32,
                              -1.0 / jnp.sqrt(hdim), 1.0 / jnp.sqrt(hdim))
    relvectors = jnp.concatenate(
        [rel0, jnp.ones((numrels, hdim), jnp.float32),
         jnp.zeros((numrels, hdim), jnp.float32)], axis=-1)

    m_b2 = lin_b(ks[4], hdim, 2 * hdim).at[:, hdim:].set(FFN_GATE_BIAS)
    u_b2 = lin_b(ks[9], hdim, 2 * hdim).at[:, hdim:].set(FFN_GATE_BIAS)

    return {
        "relvectors": relvectors,
        # msg_fn FFN: indim = 2*hdim, zdim = hdim, gated output 2*hdim
        "m_ln_g": jnp.ones((1, 2 * hdim), jnp.float32),
        "m_ln_b": jnp.zeros((1, 2 * hdim), jnp.float32),
        "m_w1": lin_w(ks[1], 2 * hdim, hdim),
        "m_b1": lin_b(ks[2], 2 * hdim, hdim),
        "m_w2": lin_w(ks[3], hdim, 2 * hdim),
        "m_b2": m_b2,
        # attention (no bias, usevallin=False)
        "wq": lin_w(ks[5], hdim, hdim),
        "wk": lin_w(ks[6], hdim, hdim),
        # update_fn FFN: indim = hdim, zdim = hdim, gated output 2*hdim
        "u_ln_g": jnp.ones((1, hdim), jnp.float32),
        "u_ln_b": jnp.zeros((1, hdim), jnp.float32),
        "u_w1": lin_w(ks[7], hdim, hdim),
        "u_b1": lin_b(ks[8], hdim, hdim),
        "u_w2": lin_w(ks[10], hdim, 2 * hdim),
        "u_b2": u_b2,
    }


if __name__ == "__main__":
    key = jax.random.PRNGKey(0)
    kp, kh, ks_, kr = jax.random.split(key, 4)

    params = init_params(kp, HDIM, NUMRELS)
    h = jax.random.normal(kh, (N, HDIM), jnp.float32)
    src_idx = jax.random.randint(ks_, (N, S), 0, N)
    rel_ids = jax.random.randint(kr, (N, S), 0, NUMRELS)

    out = lrtm_forward(h, src_idx, rel_ids, params)
    out = jax.block_until_ready(out)

    ref = lrtm_reference(h, src_idx, rel_ids, params)
    err = float(jnp.max(jnp.abs(out - ref)))
    scale = max(1.0, float(jnp.max(jnp.abs(ref))))
    # Mailbox streams are bf16 and kernel matmuls run at default MXU precision
    # while the reference is f32 Precision.HIGHEST; check to 2% of output scale.
    assert err < 2e-2 * scale, f"max abs error too large: {err} (ref scale {scale})"

    print("KERNEL_OK")
</pallas_src>

<mosaic_0001>
module attributes {stable_mosaic.version = 11 : i64} {
  func.func @kernel(%arg0: i32, %arg1: memref<8x128xf32, #tpu.memory_space<vmem>>, %arg2: memref<64x128xbf16, #tpu.memory_space<vmem>>, %arg3: memref<64x128xbf16, #tpu.memory_space<vmem>>, %arg4: memref<16x128xf32, #tpu.memory_space<vmem>>, %arg5: memref<11x128x128xf32, #tpu.memory_space<vmem>>, %arg6: memref<8x128xf32, #tpu.memory_space<vmem>>) attributes {dimension_semantics = [#tpu.dimension_semantics<parallel>], iteration_bounds = array<i64: 4>, scalar_prefetch = 0 : i64, scratch_operands = 0 : i64, tpu.core_type = #tpu.core_type<tc>, window_params = [{transform_indices = @transform_0, window_bounds = array<i64: 8, 128>}, {transform_indices = @transform_1, window_bounds = array<i64: 64, 128>}, {transform_indices = @transform_2, window_bounds = array<i64: 64, 128>}, {pipeline_mode = #tpu.pipeline_mode<synchronous>, transform_indices = @transform_3, window_bounds = array<i64: 16, 128>}, {pipeline_mode = #tpu.pipeline_mode<synchronous>, transform_indices = @transform_4, window_bounds = array<i64: 11, 128, 128>}, {transform_indices = @transform_5, window_bounds = array<i64: 8, 128>}]} {
    %c0 = arith.constant 0 : index
    %c0_0 = arith.constant 0 : index
    %0 = vector.load %arg4[%c0, %c0_0] : memref<16x128xf32, #tpu.memory_space<vmem>>, vector<16x128xf32>
    %1 = vector.extract_strided_slice %0 {offsets = [0, 0], sizes = [1, 128], strides = [1, 1]} : vector<16x128xf32> to vector<1x128xf32>
    %2 = vector.extract_strided_slice %0 {offsets = [1, 0], sizes = [1, 128], strides = [1, 1]} : vector<16x128xf32> to vector<1x128xf32>
    %3 = vector.extract_strided_slice %0 {offsets = [2, 0], sizes = [1, 128], strides = [1, 1]} : vector<16x128xf32> to vector<1x128xf32>
    %4 = vector.extract_strided_slice %0 {offsets = [3, 0], sizes = [1, 128], strides = [1, 1]} : vector<16x128xf32> to vector<1x128xf32>
    %5 = vector.extract_strided_slice %0 {offsets = [4, 0], sizes = [1, 128], strides = [1, 1]} : vector<16x128xf32> to vector<1x128xf32>
    %6 = vector.extract_strided_slice %0 {offsets = [5, 0], sizes = [1, 128], strides = [1, 1]} : vector<16x128xf32> to vector<1x128xf32>
    %7 = vector.extract_strided_slice %0 {offsets = [6, 0], sizes = [1, 128], strides = [1, 1]} : vector<16x128xf32> to vector<1x128xf32>
    %8 = vector.extract_strided_slice %0 {offsets = [7, 0], sizes = [1, 128], strides = [1, 1]} : vector<16x128xf32> to vector<1x128xf32>
    %9 = vector.extract_strided_slice %0 {offsets = [8, 0], sizes = [1, 128], strides = [1, 1]} : vector<16x128xf32> to vector<1x128xf32>
    %10 = vector.extract_strided_slice %0 {offsets = [9, 0], sizes = [1, 128], strides = [1, 1]} : vector<16x128xf32> to vector<1x128xf32>
    %11 = vector.extract_strided_slice %0 {offsets = [10, 0], sizes = [1, 128], strides = [1, 1]} : vector<16x128xf32> to vector<1x128xf32>
    %12 = vector.extract_strided_slice %0 {offsets = [11, 0], sizes = [1, 128], strides = [1, 1]} : vector<16x128xf32> to vector<1x128xf32>
    %c0_1 = arith.constant 0 : index
    %c0_2 = arith.constant 0 : index
    %13 = vector.load %arg2[%c0_1, %c0_2] : memref<64x128xbf16, #tpu.memory_space<vmem>>, vector<64x128xbf16>
    %14 = arith.extf %13 : vector<64x128xbf16> to vector<64x128xf32>
    %c0_3 = arith.constant 0 : index
    %c0_4 = arith.constant 0 : index
    %15 = vector.load %arg3[%c0_3, %c0_4] : memref<64x128xbf16, #tpu.memory_space<vmem>>, vector<64x128xbf16>
    %16 = arith.extf %15 : vector<64x128xbf16> to vector<64x128xf32>
    %17 = arith.addf %14, %16 : vector<64x128xf32>
    %c9 = arith.constant 9 : index
    %c0_5 = arith.constant 0 : index
    %c0_6 = arith.constant 0 : index
    %18 = vector.load %arg5[%c9, %c0_5, %c0_6] : memref<11x128x128xf32, #tpu.memory_space<vmem>>, vector<1x128x128xf32>
    %19 = vector.shape_cast %18 : vector<1x128x128xf32> to vector<128x128xf32>
    %cst = arith.constant dense<0.000000e+00> : vector<64x128xf32>
    %20 = tpu.matmul %17, %19, %cst {dimension_numbers = #tpu.dot_dimension_numbers<[1], [0], [0], [1], [0, 0, 1, 1], [], []>} : vector<64x128xf32>, vector<128x128xf32>, vector<64x128xf32> -> vector<64x128xf32>
    %cst_7 = arith.constant 1.562500e-02 : f32
    %21 = vector.broadcast %cst_7 : f32 to vector<64x128xf32>
    %22 = arith.mulf %20, %21 : vector<64x128xf32>
    %23 = arith.subf %14, %22 : vector<64x128xf32>
    %24 = arith.subf %16, %22 : vector<64x128xf32>
    %25 = arith.mulf %23, %23 : vector<64x128xf32>
    %26 = arith.mulf %24, %24 : vector<64x128xf32>
    %27 = arith.addf %25, %26 : vector<64x128xf32>
    %c9_8 = arith.constant 9 : index
    %c0_9 = arith.constant 0 : index
    %c0_10 = arith.constant 0 : index
    %28 = vector.load %arg5[%c9_8, %c0_9, %c0_10] : memref<11x128x128xf32, #tpu.memory_space<vmem>>, vector<1x128x128xf32>
    %29 = vector.shape_cast %28 : vector<1x128x128xf32> to vector<128x128xf32>
    %cst_11 = arith.constant dense<0.000000e+00> : vector<64x128xf32>
    %30 = tpu.matmul %27, %29, %cst_11 {dimension_numbers = #tpu.dot_dimension_numbers<[1], [0], [0], [1], [0, 0, 1, 1], [], []>} : vector<64x128xf32>, vector<128x128xf32>, vector<64x128xf32> -> vector<64x128xf32>
    %cst_12 = arith.constant 1.562500e-02 : f32
    %31 = vector.broadcast %cst_12 : f32 to vector<64x128xf32>
    %32 = arith.mulf %30, %31 : vector<64x128xf32>
    %cst_13 = arith.constant 9.99999974E-6 : f32
    %33 = vector.broadcast %cst_13 : f32 to vector<64x128xf32>
    %34 = arith.addf %32, %33 : vector<64x128xf32>
    %35 = math.rsqrt %34 : vector<64x128xf32>
    %36 = arith.mulf %23, %35 : vector<64x128xf32>
    %37 = vector.broadcast %1 : vector<1x128xf32> to vector<64x128xf32>
    %38 = arith.mulf %36, %37 : vector<64x128xf32>
    %39 = vector.broadcast %3 : vector<1x128xf32> to vector<64x128xf32>
    %40 = arith.addf %38, %39 : vector<64x128xf32>
    %41 = arith.mulf %24, %35 : vector<64x128xf32>
    %42 = vector.broadcast %2 : vector<1x128xf32> to vector<64x128xf32>
    %43 = arith.mulf %41, %42 : vector<64x128xf32>
    %44 = vector.broadcast %4 : vector<1x128xf32> to vector<64x128xf32>
    %45 = arith.addf %43, %44 : vector<64x128xf32>
    %c0_14 = arith.constant 0 : index
    %c0_15 = arith.constant 0 : index
    %c0_16 = arith.constant 0 : index
    %46 = vector.load %arg5[%c0_14, %c0_15, %c0_16] : memref<11x128x128xf32, #tpu.memory_space<vmem>>, vector<1x128x128xf32>
    %47 = vector.shape_cast %46 : vector<1x128x128xf32> to vector<128x128xf32>
    %cst_17 = arith.constant dense<0.000000e+00> : vector<64x128xf32>
    %48 = tpu.matmul %40, %47, %cst_17 {dimension_numbers = #tpu.dot_dimension_numbers<[1], [0], [0], [1], [0, 0, 1, 1], [], []>} : vector<64x128xf32>, vector<128x128xf32>, vector<64x128xf32> -> vector<64x128xf32>
    %c1 = arith.constant 1 : index
    %c0_18 = arith.constant 0 : index
    %c0_19 = arith.constant 0 : index
    %49 = vector.load %arg5[%c1, %c0_18, %c0_19] : memref<11x128x128xf32, #tpu.memory_space<vmem>>, vector<1x128x128xf32>
    %50 = vector.shape_cast %49 : vector<1x128x128xf32> to vector<128x128xf32>
    %cst_20 = arith.constant dense<0.000000e+00> : vector<64x128xf32>
    %51 = tpu.matmul %45, %50, %cst_20 {dimension_numbers = #tpu.dot_dimension_numbers<[1], [0], [0], [1], [0, 0, 1, 1], [], []>} : vector<64x128xf32>, vector<128x128xf32>, vector<64x128xf32> -> vector<64x128xf32>
    %52 = arith.addf %48, %51 : vector<64x128xf32>
    %53 = vector.broadcast %5 : vector<1x128xf32> to vector<64x128xf32>
    %54 = arith.addf %52, %53 : vector<64x128xf32>
    %cst_21 = arith.constant 0.000000e+00 : f32
    %55 = vector.broadcast %cst_21 : f32 to vector<64x128xf32>
    %56 = arith.cmpf ogt, %54, %55 : vector<64x128xf32>
    %cst_22 = arith.constant 0.000000e+00 : f32
    %57 = vector.broadcast %cst_22 : f32 to vector<64x128xf32>
    %58 = arith.minimumf %54, %57 : vector<64x128xf32>
    %59 = math.exp %58 : vector<64x128xf32>
    %cst_23 = arith.constant 1.000000e+00 : f32
    %60 = vector.broadcast %cst_23 : f32 to vector<64x128xf32>
    %61 = arith.subf %59, %60 : vector<64x128xf32>
    %62 = arith.select %56, %54, %61 : vector<64x128xi1>, vector<64x128xf32>
    %c2 = arith.constant 2 : index
    %c0_24 = arith.constant 0 : index
    %c0_25 = arith.constant 0 : index
    %63 = vector.load %arg5[%c2, %c0_24, %c0_25] : memref<11x128x128xf32, #tpu.memory_space<vmem>>, vector<1x128x128xf32>
    %64 = vector.shape_cast %63 : vector<1x128x128xf32> to vector<128x128xf32>
    %cst_26 = arith.constant dense<0.000000e+00> : vector<64x128xf32>
    %65 = tpu.matmul %62, %64, %cst_26 {dimension_numbers = #tpu.dot_dimension_numbers<[1], [0], [0], [1], [0, 0, 1, 1], [], []>} : vector<64x128xf32>, vector<128x128xf32>, vector<64x128xf32> -> vector<64x128xf32>
    %66 = vector.broadcast %6 : vector<1x128xf32> to vector<64x128xf32>
    %67 = arith.addf %65, %66 : vector<64x128xf32>
    %c3 = arith.constant 3 : index
    %c0_27 = arith.constant 0 : index
    %c0_28 = arith.constant 0 : index
    %68 = vector.load %arg5[%c3, %c0_27, %c0_28] : memref<11x128x128xf32, #tpu.memory_space<vmem>>, vector<1x128x128xf32>
    %69 = vector.shape_cast %68 : vector<1x128x128xf32> to vector<128x128xf32>
    %cst_29 = arith.constant dense<0.000000e+00> : vector<64x128xf32>
    %70 = tpu.matmul %62, %69, %cst_29 {dimension_numbers = #tpu.dot_dimension_numbers<[1], [0], [0], [1], [0, 0, 1, 1], [], []>} : vector<64x128xf32>, vector<128x128xf32>, vector<64x128xf32> -> vector<64x128xf32>
    %71 = vector.broadcast %7 : vector<1x128xf32> to vector<64x128xf32>
    %72 = arith.addf %70, %71 : vector<64x128xf32>
    %73 = arith.negf %72 : vector<64x128xf32>
    %74 = math.exp %73 : vector<64x128xf32>
    %cst_30 = arith.constant 1.000000e+00 : f32
    %75 = vector.broadcast %cst_30 : f32 to vector<64x128xf32>
    %76 = arith.addf %75, %74 : vector<64x128xf32>
    %77 = arith.divf %75, %76 : vector<64x128xf32>
    %78 = arith.mulf %77, %67 : vector<64x128xf32>
    %79 = arith.addf %14, %78 : vector<64x128xf32>
    %c0_31 = arith.constant 0 : index
    %c0_32 = arith.constant 0 : index
    %80 = vector.load %arg1[%c0_31, %c0_32] : memref<8x128xf32, #tpu.memory_space<vmem>>, vector<8x128xf32>
    %c4 = arith.constant 4 : index
    %c0_33 = arith.constant 0 : index
    %c0_34 = arith.constant 0 : index
    %81 = vector.load %arg5[%c4, %c0_33, %c0_34] : memref<11x128x128xf32, #tpu.memory_space<vmem>>, vector<1x128x128xf32>
    %82 = vector.shape_cast %81 : vector<1x128x128xf32> to vector<128x128xf32>
    %cst_35 = arith.constant dense<0.000000e+00> : vector<8x128xf32>
    %83 = tpu.matmul %80, %82, %cst_35 {dimension_numbers = #tpu.dot_dimension_numbers<[1], [0], [0], [1], [0, 0, 1, 1], [], []>} : vector<8x128xf32>, vector<128x128xf32>, vector<8x128xf32> -> vector<8x128xf32>
    %c5 = arith.constant 5 : index
    %c0_36 = arith.constant 0 : index
    %c0_37 = arith.constant 0 : index
    %84 = vector.load %arg5[%c5, %c0_36, %c0_37] : memref<11x128x128xf32, #tpu.memory_space<vmem>>, vector<1x128x128xf32>
    %85 = vector.shape_cast %84 : vector<1x128x128xf32> to vector<128x128xf32>
    %cst_38 = arith.constant dense<0.000000e+00> : vector<64x128xf32>
    %86 = tpu.matmul %79, %85, %cst_38 {dimension_numbers = #tpu.dot_dimension_numbers<[1], [0], [0], [1], [0, 0, 1, 1], [], []>} : vector<64x128xf32>, vector<128x128xf32>, vector<64x128xf32> -> vector<64x128xf32>
    %87 = vector.shape_cast %86 : vector<64x128xf32> to vector<8x8x128xf32>
    %88 = vector.shape_cast %79 : vector<64x128xf32> to vector<8x8x128xf32>
    %89 = vector.shape_cast %83 : vector<8x128xf32> to vector<8x1x128xf32>
    %90 = vector.broadcast %89 : vector<8x1x128xf32> to vector<8x8x128xf32>
    %91 = arith.mulf %90, %87 : vector<8x8x128xf32>
    %92 = vector.shape_cast %91 : vector<8x8x128xf32> to vector<64x128xf32>
    %c10 = arith.constant 10 : index
    %c0_39 = arith.constant 0 : index
    %c0_40 = arith.constant 0 : index
    %93 = vector.load %arg5[%c10, %c0_39, %c0_40] : memref<11x128x128xf32, #tpu.memory_space<vmem>>, vector<1x128x128xf32>
    %94 = vector.shape_cast %93 : vector<1x128x128xf32> to vector<128x128xf32>
    %cst_41 = arith.constant dense<0.000000e+00> : vector<64x128xf32>
    %95 = tpu.matmul %92, %94, %cst_41 {dimension_numbers = #tpu.dot_dimension_numbers<[1], [0], [0], [1], [0, 0, 1, 1], [], []>} : vector<64x128xf32>, vector<128x128xf32>, vector<64x128xf32> -> vector<64x128xf32>
    %96 = vector.shape_cast %95 : vector<64x128xf32> to vector<8x8x128xf32>
    %cst_42 = arith.constant dense<0xFF800000> : vector<8x128xf32>
    %97 = vector.multi_reduction <maximumf>, %96, %cst_42 [1] : vector<8x8x128xf32> to vector<8x128xf32>
    %98 = vector.shape_cast %97 : vector<8x128xf32> to vector<8x1x128xf32>
    %99 = vector.broadcast %98 : vector<8x1x128xf32> to vector<8x8x128xf32>
    %100 = arith.subf %96, %99 : vector<8x8x128xf32>
    %101 = math.exp %100 : vector<8x8x128xf32>
    %cst_43 = arith.constant dense<0.000000e+00> : vector<8x128xf32>
    %102 = vector.multi_reduction <add>, %101, %cst_43 [1] : vector<8x8x128xf32> to vector<8x128xf32>
    %103 = vector.shape_cast %102 : vector<8x128xf32> to vector<8x1x128xf32>
    %104 = tpu.reciprocal %103 {approx = true} : vector<8x1x128xf32> -> vector<8x1x128xf32>
    %105 = vector.broadcast %104 : vector<8x1x128xf32> to vector<8x8x128xf32>
    %106 = arith.mulf %101, %105 : vector<8x8x128xf32>
    %107 = arith.mulf %106, %88 : vector<8x8x128xf32>
    %cst_44 = arith.constant dense<0.000000e+00> : vector<8x128xf32>
    %108 = vector.multi_reduction <add>, %107, %cst_44 [1] : vector<8x8x128xf32> to vector<8x128xf32>
    %c9_45 = arith.constant 9 : index
    %c0_46 = arith.constant 0 : index
    %c0_47 = arith.constant 0 : index
    %109 = vector.load %arg5[%c9_45, %c0_46, %c0_47] : memref<11x128x128xf32, #tpu.memory_space<vmem>>, vector<1x128x128xf32>
    %110 = vector.shape_cast %109 : vector<1x128x128xf32> to vector<128x128xf32>
    %cst_48 = arith.constant dense<0.000000e+00> : vector<8x128xf32>
    %111 = tpu.matmul %108, %110, %cst_48 {dimension_numbers = #tpu.dot_dimension_numbers<[1], [0], [0], [1], [0, 0, 1, 1], [], []>} : vector<8x128xf32>, vector<128x128xf32>, vector<8x128xf32> -> vector<8x128xf32>
    %cst_49 = arith.constant 3.125000e-02 : f32
    %112 = vector.broadcast %cst_49 : f32 to vector<8x128xf32>
    %113 = arith.mulf %111, %112 : vector<8x128xf32>
    %114 = arith.subf %108, %113 : vector<8x128xf32>
    %115 = arith.mulf %114, %114 : vector<8x128xf32>
    %c9_50 = arith.constant 9 : index
    %c0_51 = arith.constant 0 : index
    %c0_52 = arith.constant 0 : index
    %116 = vector.load %arg5[%c9_50, %c0_51, %c0_52] : memref<11x128x128xf32, #tpu.memory_space<vmem>>, vector<1x128x128xf32>
    %117 = vector.shape_cast %116 : vector<1x128x128xf32> to vector<128x128xf32>
    %cst_53 = arith.constant dense<0.000000e+00> : vector<8x128xf32>
    %118 = tpu.matmul %115, %117, %cst_53 {dimension_numbers = #tpu.dot_dimension_numbers<[1], [0], [0], [1], [0, 0, 1, 1], [], []>} : vector<8x128xf32>, vector<128x128xf32>, vector<8x128xf32> -> vector<8x128xf32>
    %cst_54 = arith.constant 3.125000e-02 : f32
    %119 = vector.broadcast %cst_54 : f32 to vector<8x128xf32>
    %120 = arith.mulf %118, %119 : vector<8x128xf32>
    %cst_55 = arith.constant 9.99999974E-6 : f32
    %121 = vector.broadcast %cst_55 : f32 to vector<8x128xf32>
    %122 = arith.addf %120, %121 : vector<8x128xf32>
    %123 = math.rsqrt %122 : vector<8x128xf32>
    %124 = arith.mulf %114, %123 : vector<8x128xf32>
    %125 = vector.broadcast %8 : vector<1x128xf32> to vector<8x128xf32>
    %126 = arith.mulf %124, %125 : vector<8x128xf32>
    %127 = vector.broadcast %9 : vector<1x128xf32> to vector<8x128xf32>
    %128 = arith.addf %126, %127 : vector<8x128xf32>
    %c6 = arith.constant 6 : index
    %c0_56 = arith.constant 0 : index
    %c0_57 = arith.constant 0 : index
    %129 = vector.load %arg5[%c6, %c0_56, %c0_57] : memref<11x128x128xf32, #tpu.memory_space<vmem>>, vector<1x128x128xf32>
    %130 = vector.shape_cast %129 : vector<1x128x128xf32> to vector<128x128xf32>
    %cst_58 = arith.constant dense<0.000000e+00> : vector<8x128xf32>
    %131 = tpu.matmul %128, %130, %cst_58 {dimension_numbers = #tpu.dot_dimension_numbers<[1], [0], [0], [1], [0, 0, 1, 1], [], []>} : vector<8x128xf32>, vector<128x128xf32>, vector<8x128xf32> -> vector<8x128xf32>
    %132 = vector.broadcast %10 : vector<1x128xf32> to vector<8x128xf32>
    %133 = arith.addf %131, %132 : vector<8x128xf32>
    %cst_59 = arith.constant 0.000000e+00 : f32
    %134 = vector.broadcast %cst_59 : f32 to vector<8x128xf32>
    %135 = arith.cmpf ogt, %133, %134 : vector<8x128xf32>
    %cst_60 = arith.constant 0.000000e+00 : f32
    %136 = vector.broadcast %cst_60 : f32 to vector<8x128xf32>
    %137 = arith.minimumf %133, %136 : vector<8x128xf32>
    %138 = math.exp %137 : vector<8x128xf32>
    %cst_61 = arith.constant 1.000000e+00 : f32
    %139 = vector.broadcast %cst_61 : f32 to vector<8x128xf32>
    %140 = arith.subf %138, %139 : vector<8x128xf32>
    %141 = arith.select %135, %133, %140 : vector<8x128xi1>, vector<8x128xf32>
    %c7 = arith.constant 7 : index
    %c0_62 = arith.constant 0 : index
    %c0_63 = arith.constant 0 : index
    %142 = vector.load %arg5[%c7, %c0_62, %c0_63] : memref<11x128x128xf32, #tpu.memory_space<vmem>>, vector<1x128x128xf32>
    %143 = vector.shape_cast %142 : vector<1x128x128xf32> to vector<128x128xf32>
    %cst_64 = arith.constant dense<0.000000e+00> : vector<8x128xf32>
    %144 = tpu.matmul %141, %143, %cst_64 {dimension_numbers = #tpu.dot_dimension_numbers<[1], [0], [0], [1], [0, 0, 1, 1], [], []>} : vector<8x128xf32>, vector<128x128xf32>, vector<8x128xf32> -> vector<8x128xf32>
    %145 = vector.broadcast %11 : vector<1x128xf32> to vector<8x128xf32>
    %146 = arith.addf %144, %145 : vector<8x128xf32>
    %c8 = arith.constant 8 : index
    %c0_65 = arith.constant 0 : index
    %c0_66 = arith.constant 0 : index
    %147 = vector.load %arg5[%c8, %c0_65, %c0_66] : memref<11x128x128xf32, #tpu.memory_space<vmem>>, vector<1x128x128xf32>
    %148 = vector.shape_cast %147 : vector<1x128x128xf32> to vector<128x128xf32>
    %cst_67 = arith.constant dense<0.000000e+00> : vector<8x128xf32>
    %149 = tpu.matmul %141, %148, %cst_67 {dimension_numbers = #tpu.dot_dimension_numbers<[1], [0], [0], [1], [0, 0, 1, 1], [], []>} : vector<8x128xf32>, vector<128x128xf32>, vector<8x128xf32> -> vector<8x128xf32>
    %150 = vector.broadcast %12 : vector<1x128xf32> to vector<8x128xf32>
    %151 = arith.addf %149, %150 : vector<8x128xf32>
    %152 = arith.negf %151 : vector<8x128xf32>
    %153 = math.exp %152 : vector<8x128xf32>
    %cst_68 = arith.constant 1.000000e+00 : f32
    %154 = vector.broadcast %cst_68 : f32 to vector<8x128xf32>
    %155 = arith.addf %154, %153 : vector<8x128xf32>
    %156 = arith.divf %154, %155 : vector<8x128xf32>
    %157 = arith.mulf %156, %146 : vector<8x128xf32>
    %158 = arith.addf %80, %157 : vector<8x128xf32>
    %c0_69 = arith.constant 0 : index
    %c0_70 = arith.constant 0 : index
    %159 = vector.load %arg6[%c0_69, %c0_70] : memref<8x128xf32, #tpu.memory_space<vmem>>, vector<8x128xf32>
    tpu.vector_store %arg6[%c0_69, %c0_70], %158 {strides = array<i32>} : memref<8x128xf32, #tpu.memory_space<vmem>>, vector<8x128xf32>,
    return
  }
  func.func @transform_0(%arg0: i32) -> (i32, i32) {
    %c0_i32 = arith.constant 0 : i32
    %c0_i32_0 = arith.constant 0 : i32
    return %arg0, %c0_i32 : i32, i32
  }
  func.func @transform_1(%arg0: i32) -> (i32, i32) {
    %c0_i32 = arith.constant 0 : i32
    %c0_i32_0 = arith.constant 0 : i32
    return %arg0, %c0_i32 : i32, i32
  }
  func.func @transform_2(%arg0: i32) -> (i32, i32) {
    %c0_i32 = arith.constant 0 : i32
    %c0_i32_0 = arith.constant 0 : i32
    return %arg0, %c0_i32 : i32, i32
  }
  func.func @transform_3(%arg0: i32) -> (i32, i32) {
    %c0_i32 = arith.constant 0 : i32
    %c0_i32_0 = arith.constant 0 : i32
    %c0_i32_1 = arith.constant 0 : i32
    return %c0_i32, %c0_i32_0 : i32, i32
  }
  func.func @transform_4(%arg0: i32) -> (i32, i32, i32) {
    %c0_i32 = arith.constant 0 : i32
    %c0_i32_0 = arith.constant 0 : i32
    %c0_i32_1 = arith.constant 0 : i32
    %c0_i32_2 = arith.constant 0 : i32
    return %c0_i32, %c0_i32_0, %c0_i32_1 : i32, i32, i32
  }
  func.func @transform_5(%arg0: i32) -> (i32, i32) {
    %c0_i32 = arith.constant 0 : i32
    %c0_i32_0 = arith.constant 0 : i32
    return %arg0, %c0_i32 : i32, i32
  }
}

</mosaic_0001>

<llo_original>
// kernel: tpu_custom_call.1
$region0: #{tpu_custom_call.1}
  #allocation0 [shape = 'u32[]', space=smem, size = 0x4, offset = 0x4, fixed_abs, tag = 'smem constant byte address 0x4 - core index']
  #allocation1 [shape = 'u32[144,128]{1,0:T(1,128)}', space=vmem, size = 0x12000, scoped, tag = 'internal scratch']
  %s0 = inlined_call_operand.hbm [shape: f32[32,128], index: 0, kind: input, shape index: {}]
  %s1 = inlined_call_operand.hbm [shape: bf16[256,128], index: 1, kind: input, shape index: {}]
  %s2 = inlined_call_operand.hbm [shape: bf16[256,128], index: 2, kind: input, shape index: {}]
  %s3 = inlined_call_operand.hbm [shape: f32[16,128], index: 3, kind: input, shape index: {}]
  %s4 = inlined_call_operand.hbm [shape: f32[11,128,128], index: 4, kind: input, shape index: {}]
  %s5 = inlined_call_operand.hbm [shape: f32[32,128], index: 5, kind: output, shape index: {}]
  %s6 = sld [smem:[#allocation0]]
  $region73: #{tpu_custom_call.1} parent=0
    _
  %s8 = ssub.s32 1, %s6
  %s9 = scalar_select 0, %s8, %s6
  $region1: #{tpu_custom_call.1} parent=0
    #allocation2 [shape = 'u8[8192]{0}', space=vmem, size = 0x2000, scoped, tag = 'input window, operand 0']
    #allocation3 [shape = 's32[2]{0}', space=sflag, size = 0x8, scoped, tag = 'scoped memory for tpu_custom_call.1']
    #allocation4 [shape = 's32[2]{0}', space=sflag, size = 0x8, scoped, tag = 'scoped memory for tpu_custom_call.1']
    #allocation5 [shape = 'u8[32768]{0}', space=vmem, size = 0x8000, scoped, tag = 'input window, operand 1']
    #allocation6 [shape = 's32[2]{0}', space=sflag, size = 0x8, scoped, tag = 'scoped memory for tpu_custom_call.1']
    #allocation7 [shape = 'u8[32768]{0}', space=vmem, size = 0x8000, scoped, tag = 'input window, operand 2']
    #allocation8 [shape = 'u8[8192]{0}', space=vmem, size = 0x2000, scoped, tag = 'input window, operand 3, single buffered']
    #allocation9 [shape = 's32[1]{0}', space=sflag, size = 0x4, scoped, tag = 'scoped memory for tpu_custom_call.1']
    #allocation10 [shape = 'u8[720896]{0}', space=vmem, size = 0xb0000, scoped, tag = 'input window, operand 4, single buffered']
    #allocation11 [shape = 'u8[8192]{0}', space=vmem, size = 0x2000, scoped, tag = 'output window, operand 0']
    %10 = vsyncpa [#allocation3], 0
    %s11 = scalar_lea.sflag [#allocation3], 1
    %12 = vsyncpa %s11, 0
    %13 = vsyncpa [#allocation6], 0
    %s14 = scalar_lea.sflag [#allocation6], 1
    %15 = vsyncpa %s14, 0
    %16 = vsyncpa [#allocation9], 0
    %17 = vsyncpa [#allocation4], 0
    %s18 = scalar_lea.sflag [#allocation4], 1
    %19 = vsyncpa %s18, 0
    loop: start=0, step=1, limit=6
    $region2: #{tpu_custom_call.1} parent=1 // loop_pre_header
      _
    $region3: #{tpu_custom_call.1} parent=1 // loop_header
      %s21 = sphi 0, %s25
      %p22 = scmp.ge.s32.totalorder %s21, 6
      %s31 = sphi 0, %s33
      %s34 = sphi 0, %s31
      %s35 = sphi 0, %s34
      %s51 = sphi 0, %s35
      %s57 = sphi 0, %s59
      %s60 = sphi 0, %s57
      %s61 = sphi 0, %s60
      %s77 = sphi 0, %s61
      %s83 = sphi 0, %s85
      %s86 = sphi 0, %s83
      %s87 = sphi 0, %s86
      %s103 = sphi 0, %s87
      %s107 = sphi 0, %s107
      %s109 = sphi 0, %s107
      %s110 = sphi 0, %s109
      %s124 = sphi 0, %s110
      %s128 = sphi 0, %s128
      %s130 = sphi 0, %s128
      %s131 = sphi 0, %s130
      %s145 = sphi 0, %s131
      %s151 = sphi 0, %s153
      %s154 = sphi 0, %s151
      %s155 = sphi 0, %s154
      %s171 = sphi 0, %s155
    $region4: #{tpu_custom_call.1} parent=1 // loop_header_branch
      %24 = sbr.rel (%p22) target = $region8
    $region5: #{tpu_custom_call.1} parent=1 // loop_body
      %s26 = ssub.s32 %s21, 1
      %s27 = ssub.s32 %s21, 2
      %s28 = sadd.s32 %s21, 1
      %s29 = ssub.s32 %s21, %s28
      %p30 = scmp.eq.s32.totalorder %s29, 0
      %s32 = sadd.s32 %s31, 1
      %s33 = scalar_select %p30, %s31, %s32
      %p36 = pneg %p30
      %p37 = scmp.eq.s32.totalorder %s21, 3
      %p38 = por %p36, %p37
      %p39 = scmp.ne.s32.totalorder %s31, %s34
      %p40 = scmp.eq.s32.totalorder %s21, 0
      %p41 = por %p39, %p40
      %p42 = scmp.ne.s32.totalorder %s31, %s34
      %p43 = scmp.eq.s32.totalorder %s26, 3
      %p44 = por %p42, %p43
      %p45 = scmp.ne.s32.totalorder %s34, %s35
      %p46 = scmp.eq.s32.totalorder %s26, 0
      %p47 = por %p45, %p46
      %p48 = scmp.ne.s32.totalorder %s34, %s35
      %p49 = scmp.eq.s32.totalorder %s27, 3
      %p50 = por %p48, %p49
      %p52 = scmp.ne.s32.totalorder %s35, %s51
      %p53 = scmp.eq.s32.totalorder %s27, 0
      %p54 = por %p52, %p53
      %s55 = ssub.s32 %s21, %s28
      %p56 = scmp.eq.s32.totalorder %s55, 0
      %s58 = sadd.s32 %s57, 1
      %s59 = scalar_select %p56, %s57, %s58
      %p62 = pneg %p56
      %p63 = scmp.eq.s32.totalorder %s21, 3
      %p64 = por %p62, %p63
      %p65 = scmp.ne.s32.totalorder %s57, %s60
      %p66 = scmp.eq.s32.totalorder %s21, 0
      %p67 = por %p65, %p66
      %p68 = scmp.ne.s32.totalorder %s57, %s60
      %p69 = scmp.eq.s32.totalorder %s26, 3
      %p70 = por %p68, %p69
      %p71 = scmp.ne.s32.totalorder %s60, %s61
      %p72 = scmp.eq.s32.totalorder %s26, 0
      %p73 = por %p71, %p72
      %p74 = scmp.ne.s32.totalorder %s60, %s61
      %p75 = scmp.eq.s32.totalorder %s27, 3
      %p76 = por %p74, %p75
      %p78 = scmp.ne.s32.totalorder %s61, %s77
      %p79 = scmp.eq.s32.totalorder %s27, 0
      %p80 = por %p78, %p79
      %s81 = ssub.s32 %s21, %s28
      %p82 = scmp.eq.s32.totalorder %s81, 0
      %s84 = sadd.s32 %s83, 1
      %s85 = scalar_select %p82, %s83, %s84
      %p88 = pneg %p82
      %p89 = scmp.eq.s32.totalorder %s21, 3
      %p90 = por %p88, %p89
      %p91 = scmp.ne.s32.totalorder %s83, %s86
      %p92 = scmp.eq.s32.totalorder %s21, 0
      %p93 = por %p91, %p92
      %p94 = scmp.ne.s32.totalorder %s83, %s86
      %p95 = scmp.eq.s32.totalorder %s26, 3
      %p96 = por %p94, %p95
      %p97 = scmp.ne.s32.totalorder %s86, %s87
      %p98 = scmp.eq.s32.totalorder %s26, 0
      %p99 = por %p97, %p98
      %p100 = scmp.ne.s32.totalorder %s86, %s87
      %p101 = scmp.eq.s32.totalorder %s27, 3
      %p102 = por %p100, %p101
      %p104 = scmp.ne.s32.totalorder %s87, %s103
      %p105 = scmp.eq.s32.totalorder %s27, 0
      %p106 = por %p104, %p105
      %s108 = sadd.s32 %s107, 1
      %p111 = scmp.eq.s32.totalorder %s21, 3
      %p112 = scmp.ne.s32.totalorder %s107, %s109
      %p113 = scmp.eq.s32.totalorder %s21, 0
      %p114 = por %p112, %p113
      %p115 = scmp.ne.s32.totalorder %s107, %s109
      %p116 = scmp.eq.s32.totalorder %s26, 3
      %p117 = por %p115, %p116
      %p118 = scmp.ne.s32.totalorder %s109, %s110
      %p119 = scmp.eq.s32.totalorder %s26, 0
      %p120 = por %p118, %p119
      %p121 = scmp.ne.s32.totalorder %s109, %s110
      %p122 = scmp.eq.s32.totalorder %s27, 3
      %p123 = por %p121, %p122
      %p125 = scmp.ne.s32.totalorder %s110, %s124
      %p126 = scmp.eq.s32.totalorder %s27, 0
      %p127 = por %p125, %p126
      %s129 = sadd.s32 %s128, 1
      %p132 = scmp.eq.s32.totalorder %s21, 3
      %p133 = scmp.ne.s32.totalorder %s128, %s130
      %p134 = scmp.eq.s32.totalorder %s21, 0
      %p135 = por %p133, %p134
      %p136 = scmp.ne.s32.totalorder %s128, %s130
      %p137 = scmp.eq.s32.totalorder %s26, 3
      %p138 = por %p136, %p137
      %p139 = scmp.ne.s32.totalorder %s130, %s131
      %p140 = scmp.eq.s32.totalorder %s26, 0
      %p141 = por %p139, %p140
      %p142 = scmp.ne.s32.totalorder %s130, %s131
      %p143 = scmp.eq.s32.totalorder %s27, 3
      %p144 = por %p142, %p143
      %p146 = scmp.ne.s32.totalorder %s131, %s145
      %p147 = scmp.eq.s32.totalorder %s27, 0
      %p148 = por %p146, %p147
      %s149 = ssub.s32 %s21, %s28
      %p150 = scmp.eq.s32.totalorder %s149, 0
      %s152 = sadd.s32 %s151, 1
      %s153 = scalar_select %p150, %s151, %s152
      %p156 = pneg %p150
      %p157 = scmp.eq.s32.totalorder %s21, 3
      %p158 = por %p156, %p157
      %p159 = scmp.ne.s32.totalorder %s151, %s154
      %p160 = scmp.eq.s32.totalorder %s21, 0
      %p161 = por %p159, %p160
      %p162 = scmp.ne.s32.totalorder %s151, %s154
      %p163 = scmp.eq.s32.totalorder %s26, 3
      %p164 = por %p162, %p163
      %p165 = scmp.ne.s32.totalorder %s154, %s155
      %p166 = scmp.eq.s32.totalorder %s26, 0
      %p167 = por %p165, %p166
      %p168 = scmp.ne.s32.totalorder %s154, %s155
      %p169 = scmp.eq.s32.totalorder %s27, 3
      %p170 = por %p168, %p169
      %p172 = scmp.ne.s32.totalorder %s155, %s171
      %p173 = scmp.eq.s32.totalorder %s27, 0
      %p174 = por %p172, %p173
      %p175 = scmp.le.s32.totalorder 1, %s21
      %p176 = scmp.lt.s32.totalorder %s21, 5
      %p177 = pnand %p175, %p176
      %p178 = pneg %p177
      // Predicated region
      $region9: #{tpu_custom_call.1} parent=5 // pred_check
        _
      $region10: #{tpu_custom_call.1} parent=5 // pred_check_branch
        %180 = sbr.rel (%p177) target = $region12
      $region11: #{tpu_custom_call.1} parent=5 // pred_region
        %s181 = ssub.s32 %s21, 1
        // Predicated region
        $region13: #{tpu_custom_call.1} parent=11 // pred_check
          %p182 = pneg %p120
        $region14: #{tpu_custom_call.1} parent=11 // pred_check_branch
          %184 = sbr.rel (%p182) target = $region16
        $region15: #{tpu_custom_call.1} parent=11 // pred_region
          %s186 = ssub.s32 256, 256
          %187 = vsyncadd [#allocation9], %s186
          %s188 = sshll.u32 [#allocation8], 4
          %s189 = int_to_ptr.vmem [resolvable:$true] %s188
          %194 = dma.hbm_to_vmem [thread:$0]  %s3, 256, %s189, [#allocation9], 128, 128, 8
        $region16: #{tpu_custom_call.1} parent=11 // pred_fallthru
          _
        // Predicated region
        $region17: #{tpu_custom_call.1} parent=11 // pred_check
          %p195 = pneg %p141
        $region18: #{tpu_custom_call.1} parent=11 // pred_check_branch
          %197 = sbr.rel (%p195) target = $region20
        $region19: #{tpu_custom_call.1} parent=11 // pred_region
          %s199 = ssub.s32 22528, 22528
          %200 = vsyncadd [#allocation9], %s199
          %s201 = sshll.u32 [#allocation10], 4
          %s202 = int_to_ptr.vmem [resolvable:$true] %s201
          %207 = dma.hbm_to_vmem [thread:$0]  %s4, 22528, %s202, [#allocation9], 128, 128, 8
        $region20: #{tpu_custom_call.1} parent=11 // pred_fallthru
          _
      $region12: #{tpu_custom_call.1} parent=5 // pred_fallthru
        _
      %p208 = scmp.lt.s32.totalorder %s21, 4
      // Predicated region
      $region21: #{tpu_custom_call.1} parent=5 // pred_check
        %p209 = pneg %p208
      $region22: #{tpu_custom_call.1} parent=5 // pred_check_branch
        %211 = sbr.rel (%p209) target = $region24
      $region23: #{tpu_custom_call.1} parent=5 // pred_region
        // Predicated region
        $region25: #{tpu_custom_call.1} parent=23 // pred_check
          %p212 = pneg %p41
        $region26: #{tpu_custom_call.1} parent=23 // pred_check_branch
          %214 = sbr.rel (%p212) target = $region28
        $region27: #{tpu_custom_call.1} parent=23 // pred_region
          %s215 = sand.u32 %s31, 1
          %s216 = scalar_lea.sflag [#allocation3], %s215
          %s217 = sand.u32 %s31, 1
          %s218 = smul.addr %s217, 8
          %s219 = scalar_lea.vmem [#allocation2], %s218
          %s221 = ssub.s32 128, 128
          %222 = vsyncadd %s216, %s221
          %s223 = smul.addr %s21, 128
          %s224 = scalar_lea.hbm %s0, %s223
          %s226 = sshll.u32 %s219, 4
          %s227 = int_to_ptr.vmem [resolvable:$true] %s226
          %229 = dma.hbm_to_vmem [thread:$0]  %s224, 128, %s227, %s216
        $region28: #{tpu_custom_call.1} parent=23 // pred_fallthru
          _
        // Predicated region
        $region29: #{tpu_custom_call.1} parent=23 // pred_check
          %p230 = pneg %p67
        $region30: #{tpu_custom_call.1} parent=23 // pred_check_branch
          %232 = sbr.rel (%p230) target = $region32
        $region31: #{tpu_custom_call.1} parent=23 // pred_region
          %s233 = sand.u32 %s21, 1
          %s234 = scalar_lea.sflag [#allocation6], %s233
          %s235 = sand.u32 %s57, 1
          %s236 = smul.addr %s235, 32
          %s237 = scalar_lea.vmem [#allocation5], %s236
          %s238 = smul.u32 8, %s21
          %s240 = ssub.s32 512, 512
          %241 = vsyncadd %s234, %s240
          %s242 = smul.addr %s238, 64
          %s243 = scalar_lea.hbm %s1, %s242
          %s244 = sshll.u32 %s237, 4
          %s245 = int_to_ptr.vmem [resolvable:$true] %s244
          %250 = dma.hbm_to_vmem [thread:$0]  %s243, 512, %s245, %s234, 64, 64, 4
        $region32: #{tpu_custom_call.1} parent=23 // pred_fallthru
          _
        // Predicated region
        $region33: #{tpu_custom_call.1} parent=23 // pred_check
          %p251 = pneg %p93
        $region34: #{tpu_custom_call.1} parent=23 // pred_check_branch
          %253 = sbr.rel (%p251) target = $region36
        $region35: #{tpu_custom_call.1} parent=23 // pred_region
          %s254 = sand.u32 %s21, 1
          %s255 = scalar_lea.sflag [#allocation6], %s254
          %s256 = sand.u32 %s83, 1
          %s257 = smul.addr %s256, 32
          %s258 = scalar_lea.vmem [#allocation7], %s257
          %s259 = smul.u32 8, %s21
          %s261 = ssub.s32 512, 512
          %262 = vsyncadd %s255, %s261
          %s263 = smul.addr %s259, 64
          %s264 = scalar_lea.hbm %s2, %s263
          %s265 = sshll.u32 %s258, 4
          %s266 = int_to_ptr.vmem [resolvable:$true] %s265
          %271 = dma.hbm_to_vmem [thread:$0]  %s264, 512, %s266, %s255, 64, 64, 4
        $region36: #{tpu_custom_call.1} parent=23 // pred_fallthru
          _
      $region24: #{tpu_custom_call.1} parent=5 // pred_fallthru
        _
      %p272 = scmp.le.s32.totalorder 1, %s21
      %p273 = scmp.lt.s32.totalorder %s21, 5
      %p274 = pnand %p272, %p273
      %p275 = pneg %p274
      // Predicated region
      $region37: #{tpu_custom_call.1} parent=5 // pred_check
        _
      $region38: #{tpu_custom_call.1} parent=5 // pred_check_branch
        %277 = sbr.rel (%p274) target = $region40
      $region39: #{tpu_custom_call.1} parent=5 // pred_region
        %s278 = ssub.s32 %s21, 1
        %s279 = sand.u32 %s34, 1
        %s280 = scalar_lea.sflag [#allocation3], %s279
        %s281 = sand.u32 %s34, 1
        %s282 = smul.addr %s281, 8
        %s283 = scalar_lea.vmem [#allocation2], %s282
        // Predicated region
        $region41: #{tpu_custom_call.1} parent=39 // pred_check
          %p284 = pneg %p47
        $region42: #{tpu_custom_call.1} parent=39 // pred_check_branch
          %286 = sbr.rel (%p284) target = $region44
        $region43: #{tpu_custom_call.1} parent=39 // pred_region
          %287 = dma.done %s280, 128
        $region44: #{tpu_custom_call.1} parent=39 // pred_fallthru
          _
        %s288 = sand.u32 %s26, 1
        %s289 = scalar_lea.sflag [#allocation6], %s288
        %s290 = sand.u32 %s60, 1
        %s291 = smul.addr %s290, 32
        %s292 = scalar_lea.vmem [#allocation5], %s291
        // Predicated region
        $region45: #{tpu_custom_call.1} parent=39 // pred_check
          %p293 = pneg %p73
        $region46: #{tpu_custom_call.1} parent=39 // pred_check_branch
          %295 = sbr.rel (%p293) target = $region48
        $region47: #{tpu_custom_call.1} parent=39 // pred_region
          %296 = dma.done %s289, 512
        $region48: #{tpu_custom_call.1} parent=39 // pred_fallthru
          _
        %s297 = sand.u32 %s26, 1
        %s298 = scalar_lea.sflag [#allocation6], %s297
        %s299 = sand.u32 %s86, 1
        %s300 = smul.addr %s299, 32
        %s301 = scalar_lea.vmem [#allocation7], %s300
        // Predicated region
        $region49: #{tpu_custom_call.1} parent=39 // pred_check
          %p302 = pneg %p99
        $region50: #{tpu_custom_call.1} parent=39 // pred_check_branch
          %304 = sbr.rel (%p302) target = $region52
        $region51: #{tpu_custom_call.1} parent=39 // pred_region
          %305 = dma.done %s298, 512
        $region52: #{tpu_custom_call.1} parent=39 // pred_fallthru
          _
        // Predicated region
        $region53: #{tpu_custom_call.1} parent=39 // pred_check
          %p306 = pneg %p120
        $region54: #{tpu_custom_call.1} parent=39 // pred_check_branch
          %308 = sbr.rel (%p306) target = $region56
        $region55: #{tpu_custom_call.1} parent=39 // pred_region
          %309 = dma.done [#allocation9], 256
        $region56: #{tpu_custom_call.1} parent=39 // pred_fallthru
          _
        // Predicated region
        $region57: #{tpu_custom_call.1} parent=39 // pred_check
          %p310 = pneg %p141
        $region58: #{tpu_custom_call.1} parent=39 // pred_check_branch
          %312 = sbr.rel (%p310) target = $region60
        $region59: #{tpu_custom_call.1} parent=39 // pred_region
          %313 = dma.done [#allocation9], 22528
        $region60: #{tpu_custom_call.1} parent=39 // pred_fallthru
          _
        %s314 = sand.u32 %s34, 1
        %s315 = scalar_lea.sflag [#allocation3], %s314
        %s316 = sand.u32 %s34, 1
        %s317 = smul.addr %s316, 8
        %s318 = scalar_lea.vmem [#allocation2], %s317
        %p319 = pneg %p47
        %p320 = pneg %p44
        %s321 = sand.u32 %s26, 1
        %s322 = scalar_lea.sflag [#allocation6], %s321
        %s323 = sand.u32 %s60, 1
        %s324 = smul.addr %s323, 32
        %s325 = scalar_lea.vmem [#allocation5], %s324
        %p326 = pneg %p73
        %p327 = pneg %p70
        %s328 = sand.u32 %s26, 1
        %s329 = scalar_lea.sflag [#allocation6], %s328
        %s330 = sand.u32 %s86, 1
        %s331 = smul.addr %s330, 32
        %s332 = scalar_lea.vmem [#allocation7], %s331
        %p333 = pneg %p99
        %p334 = pneg %p96
        %p335 = pneg %p120
        %p336 = pneg %p117
        %p337 = pneg %p141
        %p338 = pneg %p138
        %p339 = pneg %p167
        %p340 = pneg %p164
        %s341 = sand.u32 %s154, 1
        %s342 = scalar_lea.sflag [#allocation4], %s341
        %s343 = sand.u32 %s154, 1
        %s344 = smul.addr %s343, 8
        %s345 = scalar_lea.vmem [#allocation11], %s344
        %s346 = smul.u32 8, %s26
        %s347 = smul.u32 8, %s26
        %v348 = vld [vmem:[#allocation8] sm:$0xff]
        %v349 = vld [vmem:[#allocation8 + $0x8] sm:$0xff]
        %v350 = vld [vmem:[%s292] sm:$0xf]
        %v351 = vld [vmem:[%s292 + $0x4] sm:$0xf]
        %v352 = vld [vmem:[%s292 + $0x8] sm:$0xf]
        %v353 = vld [vmem:[%s292 + $0xc] sm:$0xf]
        %v354 = vld [vmem:[%s292 + $0x10] sm:$0xf]
        %v355 = vld [vmem:[%s292 + $0x14] sm:$0xf]
        %v356 = vld [vmem:[%s292 + $0x18] sm:$0xf]
        %v357 = vld [vmem:[%s292 + $0x1c] sm:$0xf]
        %v358 = vunpack.c.l.bf16 %v350
        %v359 = vunpack.c.l.bf16 %v351
        %v360 = vunpack.c.l.bf16 %v352
        %v361 = vunpack.c.l.bf16 %v353
        %v362 = vunpack.c.l.bf16 %v354
        %v363 = vunpack.c.l.bf16 %v355
        %v364 = vunpack.c.l.bf16 %v356
        %v365 = vunpack.c.l.bf16 %v357
        %v366 = vld [vmem:[%s301] sm:$0xf]
        %v367 = vld [vmem:[%s301 + $0x4] sm:$0xf]
        %v368 = vld [vmem:[%s301 + $0x8] sm:$0xf]
        %v369 = vld [vmem:[%s301 + $0xc] sm:$0xf]
        %v370 = vld [vmem:[%s301 + $0x10] sm:$0xf]
        %v371 = vld [vmem:[%s301 + $0x14] sm:$0xf]
        %v372 = vld [vmem:[%s301 + $0x18] sm:$0xf]
        %v373 = vld [vmem:[%s301 + $0x1c] sm:$0xf]
        %v374 = vunpack.c.l.bf16 %v366
        %v375 = vunpack.c.l.bf16 %v367
        %v376 = vunpack.c.l.bf16 %v368
        %v377 = vunpack.c.l.bf16 %v369
        %v378 = vunpack.c.l.bf16 %v370
        %v379 = vunpack.c.l.bf16 %v371
        %v380 = vunpack.c.l.bf16 %v372
        %v381 = vunpack.c.l.bf16 %v373
        %v382 = vadd.f32 %v358, %v374
        %v383 = vadd.f32 %v359, %v375
        %v384 = vadd.f32 %v360, %v376
        %v385 = vadd.f32 %v361, %v377
        %v386 = vadd.f32 %v362, %v378
        %v387 = vadd.f32 %v363, %v379
        %v388 = vadd.f32 %v364, %v380
        %v389 = vadd.f32 %v365, %v381
        %s390 = scalar_lea.vmem [#allocation10], 1152
        %v391 = vld [vmem:[%s390] sm:$0xff]
        %v392 = vld [vmem:[%s390 + $0x8] sm:$0xff]
        %v393 = vld [vmem:[%s390 + $0x10] sm:$0xff]
        %v394 = vld [vmem:[%s390 + $0x18] sm:$0xff]
        %v395 = vld [vmem:[%s390 + $0x20] sm:$0xff]
        %v396 = vld [vmem:[%s390 + $0x28] sm:$0xff]
        %v397 = vld [vmem:[%s390 + $0x30] sm:$0xff]
        %v398 = vld [vmem:[%s390 + $0x38] sm:$0xff]
        %v399 = vld [vmem:[%s390 + $0x40] sm:$0xff]
        %v400 = vld [vmem:[%s390 + $0x48] sm:$0xff]
        %v401 = vld [vmem:[%s390 + $0x50] sm:$0xff]
        %v402 = vld [vmem:[%s390 + $0x58] sm:$0xff]
        %v403 = vld [vmem:[%s390 + $0x60] sm:$0xff]
        %v404 = vld [vmem:[%s390 + $0x68] sm:$0xff]
        %v405 = vld [vmem:[%s390 + $0x70] sm:$0xff]
        %v406 = vld [vmem:[%s390 + $0x78] sm:$0xff]
        %407 = vmatprep.subr.mxu0 0.0
        %408 = vmatpush1.msra.mxu0 %v391
        %409 = vmatprep.subr.mxu0 0.0
        %410 = vmatpush1.msra.mxu0 %v392
        %411 = vmatprep.subr.mxu0 0.0
        %412 = vmatpush1.msra.mxu0 %v393
        %413 = vmatprep.subr.mxu0 0.0
        %414 = vmatpush1.msra.mxu0 %v394
        %415 = vmatprep.subr.mxu0 0.0
        %416 = vmatpush1.msra.mxu0 %v395
        %417 = vmatprep.subr.mxu0 0.0
        %418 = vmatpush1.msra.mxu0 %v396
        %419 = vmatprep.subr.mxu0 0.0
        %420 = vmatpush1.msra.mxu0 %v397
        %421 = vmatprep.subr.mxu0 0.0
        %422 = vmatpush1.msra.mxu0 %v398
        %423 = vmatprep.subr.mxu0 0.0
        %424 = vmatpush1.msra.mxu0 %v399
        %425 = vmatprep.subr.mxu0 0.0
        %426 = vmatpush1.msra.mxu0 %v400
        %427 = vmatprep.subr.mxu0 0.0
        %428 = vmatpush1.msra.mxu0 %v401
        %429 = vmatprep.subr.mxu0 0.0
        %430 = vmatpush1.msra.mxu0 %v402
        %431 = vmatprep.subr.mxu0 0.0
        %432 = vmatpush1.msra.mxu0 %v403
        %433 = vmatprep.subr.mxu0 0.0
        %434 = vmatpush1.msra.mxu0 %v404
        %435 = vmatprep.subr.mxu0 0.0
        %436 = vmatpush1.msra.mxu0 %v405
        %437 = vmatprep.subr.mxu0 0.0
        %438 = vmatpush1.msra.mxu0 %v406
        %439 = vmatprep.subr.mxu0 0.0
        %440 = vmatpush1.msra.mxu0 0.0
        %441 = vmatprep.subr.mxu0 0.0
        %442 = vmatpush1.msra.mxu0 0.0
        %443 = vmatprep.subr.mxu0 0.0
        %444 = vmatpush1.msra.mxu0 0.0
        %445 = vmatprep.subr.mxu0 0.0
        %446 = vmatpush1.msra.mxu0 0.0
        %447 = vmatprep.subr.mxu0 0.0
        %448 = vmatpush1.msra.mxu0 0.0
        %449 = vmatprep.subr.mxu0 0.0
        %450 = vmatpush1.msra.mxu0 0.0
        %451 = vmatprep.subr.mxu0 0.0
        %452 = vmatpush1.msra.mxu0 0.0
        %453 = vmatprep.subr.mxu0 0.0
        %454 = vmatpush1.msra.mxu0 0.0
        %455 = vmatprep.subr.mxu0 0.0
        %456 = vmatpush1.msra.mxu0 0.0
        %457 = vmatprep.subr.mxu0 0.0
        %458 = vmatpush1.msra.mxu0 0.0
        %459 = vmatprep.subr.mxu0 0.0
        %460 = vmatpush1.msra.mxu0 0.0
        %461 = vmatprep.subr.mxu0 0.0
        %462 = vmatpush1.msra.mxu0 0.0
        %463 = vmatprep.subr.mxu0 0.0
        %464 = vmatpush1.msra.mxu0 0.0
        %465 = vmatprep.subr.mxu0 0.0
        %466 = vmatpush1.msra.mxu0 0.0
        %467 = vmatprep.subr.mxu0 0.0
        %468 = vmatpush1.msra.mxu0 0.0
        %469 = vmatprep.subr.mxu0 0.0
        %470 = vmatpush1.msra.mxu0 0.0
        %471 = vmatprep.mubr.f32.mxu0 0.0
        %472 = vmatmul.mubr.f32.gmra.mrb[0].mxu0 %v382
        %v473 = vpop.f32.mrb[0].mxu0
        %v474 = vadd.f32 0.0, %v473
        %v475 = vpop.f32.mrb[0].mxu0
        %476 = vmatprep.mubr.f32.mxu0 0.0
        %477 = vmatmul.mubr.f32.gmra.mrb[0].mxu0 %v383
        %v478 = vpop.f32.mrb[0].mxu0
        %v479 = vadd.f32 0.0, %v478
        %v480 = vpop.f32.mrb[0].mxu0
        %481 = vmatprep.mubr.f32.mxu0 0.0
        %482 = vmatmul.mubr.f32.gmra.mrb[0].mxu0 %v384
        %v483 = vpop.f32.mrb[0].mxu0
        %v484 = vadd.f32 0.0, %v483
        %v485 = vpop.f32.mrb[0].mxu0
        %486 = vmatprep.mubr.f32.mxu0 0.0
        %487 = vmatmul.mubr.f32.gmra.mrb[0].mxu0 %v385
        %v488 = vpop.f32.mrb[0].mxu0
        %v489 = vadd.f32 0.0, %v488
        %v490 = vpop.f32.mrb[0].mxu0
        %491 = vmatprep.mubr.f32.mxu0 0.0
        %492 = vmatmul.mubr.f32.gmra.mrb[0].mxu0 %v386
        %v493 = vpop.f32.mrb[0].mxu0
        %v494 = vadd.f32 0.0, %v493
        %v495 = vpop.f32.mrb[0].mxu0
        %496 = vmatprep.mubr.f32.mxu0 0.0
        %497 = vmatmul.mubr.f32.gmra.mrb[0].mxu0 %v387
        %v498 = vpop.f32.mrb[0].mxu0
        %v499 = vadd.f32 0.0, %v498
        %v500 = vpop.f32.mrb[0].mxu0
        %501 = vmatprep.mubr.f32.mxu0 0.0
        %502 = vmatmul.mubr.f32.gmra.mrb[0].mxu0 %v388
        %v503 = vpop.f32.mrb[0].mxu0
        %v504 = vadd.f32 0.0, %v503
        %v505 = vpop.f32.mrb[0].mxu0
        %506 = vmatprep.mubr.f32.mxu0 0.0
        %507 = vmatmul.mubr.f32.gmra.mrb[0].mxu0 %v389
        %v508 = vpop.f32.mrb[0].mxu0
        %v509 = vadd.f32 0.0, %v508
        %v510 = vpop.f32.mrb[0].mxu0
        %511 = vdwg.mxu0
        %v512 = vmul.f32 %v474, 0.015625
        %v513 = vmul.f32 %v479, 0.015625
        %v514 = vmul.f32 %v484, 0.015625
        %v515 = vmul.f32 %v489, 0.015625
        %v516 = vmul.f32 %v494, 0.015625
        %v517 = vmul.f32 %v499, 0.015625
        %v518 = vmul.f32 %v504, 0.015625
        %v519 = vmul.f32 %v509, 0.015625
        %v520 = vsub.f32 %v358, %v512
        %v521 = vsub.f32 %v359, %v513
        %v522 = vsub.f32 %v360, %v514
        %v523 = vsub.f32 %v361, %v515
        %v524 = vsub.f32 %v362, %v516
        %v525 = vsub.f32 %v363, %v517
        %v526 = vsub.f32 %v364, %v518
        %v527 = vsub.f32 %v365, %v519
        %v528 = vsub.f32 %v374, %v512
        %v529 = vsub.f32 %v375, %v513
        %v530 = vsub.f32 %v376, %v514
        %v531 = vsub.f32 %v377, %v515
        %v532 = vsub.f32 %v378, %v516
        %v533 = vsub.f32 %v379, %v517
        %v534 = vsub.f32 %v380, %v518
        %v535 = vsub.f32 %v381, %v519
        %v536 = vmul.f32 %v520, %v520
        %v537 = vmul.f32 %v521, %v521
        %v538 = vmul.f32 %v522, %v522
        %v539 = vmul.f32 %v523, %v523
        %v540 = vmul.f32 %v524, %v524
        %v541 = vmul.f32 %v525, %v525
        %v542 = vmul.f32 %v526, %v526
        %v543 = vmul.f32 %v527, %v527
        %v544 = vmul.f32 %v528, %v528
        %v545 = vmul.f32 %v529, %v529
        %v546 = vmul.f32 %v530, %v530
        %v547 = vmul.f32 %v531, %v531
        %v548 = vmul.f32 %v532, %v532
        %v549 = vmul.f32 %v533, %v533
        %v550 = vmul.f32 %v534, %v534
        %v551 = vmul.f32 %v535, %v535
        %v552 = vadd.f32 %v536, %v544
        %v553 = vadd.f32 %v537, %v545
        %v554 = vadd.f32 %v538, %v546
        %v555 = vadd.f32 %v539, %v547
        %v556 = vadd.f32 %v540, %v548
        %v557 = vadd.f32 %v541, %v549
        %v558 = vadd.f32 %v542, %v550
        %v559 = vadd.f32 %v543, %v551
        %560 = vmatprep.subr.mxu0 0.0
        %561 = vmatpush1.msra.mxu0 %v391
        %562 = vmatprep.subr.mxu0 0.0
        %563 = vmatpush1.msra.mxu0 %v392
        %564 = vmatprep.subr.mxu0 0.0
        %565 = vmatpush1.msra.mxu0 %v393
        %566 = vmatprep.subr.mxu0 0.0
        %567 = vmatpush1.msra.mxu0 %v394
        %568 = vmatprep.subr.mxu0 0.0
        %569 = vmatpush1.msra.mxu0 %v395
        %570 = vmatprep.subr.mxu0 0.0
        %571 = vmatpush1.msra.mxu0 %v396
        %572 = vmatprep.subr.mxu0 0.0
        %573 = vmatpush1.msra.mxu0 %v397
        %574 = vmatprep.subr.mxu0 0.0
        %575 = vmatpush1.msra.mxu0 %v398
        %576 = vmatprep.subr.mxu0 0.0
        %577 = vmatpush1.msra.mxu0 %v399
        %578 = vmatprep.subr.mxu0 0.0
        %579 = vmatpush1.msra.mxu0 %v400
        %580 = vmatprep.subr.mxu0 0.0
        %581 = vmatpush1.msra.mxu0 %v401
        %582 = vmatprep.subr.mxu0 0.0
        %583 = vmatpush1.msra.mxu0 %v402
        %584 = vmatprep.subr.mxu0 0.0
        %585 = vmatpush1.msra.mxu0 %v403
        %586 = vmatprep.subr.mxu0 0.0
        %587 = vmatpush1.msra.mxu0 %v404
        %588 = vmatprep.subr.mxu0 0.0
        %589 = vmatpush1.msra.mxu0 %v405
        %590 = vmatprep.subr.mxu0 0.0
        %591 = vmatpush1.msra.mxu0 %v406
        %592 = vmatprep.subr.mxu0 0.0
        %593 = vmatpush1.msra.mxu0 0.0
        %594 = vmatprep.subr.mxu0 0.0
        %595 = vmatpush1.msra.mxu0 0.0
        %596 = vmatprep.subr.mxu0 0.0
        %597 = vmatpush1.msra.mxu0 0.0
        %598 = vmatprep.subr.mxu0 0.0
        %599 = vmatpush1.msra.mxu0 0.0
        %600 = vmatprep.subr.mxu0 0.0
        %601 = vmatpush1.msra.mxu0 0.0
        %602 = vmatprep.subr.mxu0 0.0
        %603 = vmatpush1.msra.mxu0 0.0
        %604 = vmatprep.subr.mxu0 0.0
        %605 = vmatpush1.msra.mxu0 0.0
        %606 = vmatprep.subr.mxu0 0.0
        %607 = vmatpush1.msra.mxu0 0.0
        %608 = vmatprep.subr.mxu0 0.0
        %609 = vmatpush1.msra.mxu0 0.0
        %610 = vmatprep.subr.mxu0 0.0
        %611 = vmatpush1.msra.mxu0 0.0
        %612 = vmatprep.subr.mxu0 0.0
        %613 = vmatpush1.msra.mxu0 0.0
        %614 = vmatprep.subr.mxu0 0.0
        %615 = vmatpush1.msra.mxu0 0.0
        %616 = vmatprep.subr.mxu0 0.0
        %617 = vmatpush1.msra.mxu0 0.0
        %618 = vmatprep.subr.mxu0 0.0
        %619 = vmatpush1.msra.mxu0 0.0
        %620 = vmatprep.subr.mxu0 0.0
        %621 = vmatpush1.msra.mxu0 0.0
        %622 = vmatprep.subr.mxu0 0.0
        %623 = vmatpush1.msra.mxu0 0.0
        %624 = vmatprep.mubr.f32.mxu0 0.0
        %625 = vmatmul.mubr.f32.gmra.mrb[0].mxu0 %v552
        %v626 = vpop.f32.mrb[0].mxu0
        %v627 = vadd.f32 0.0, %v626
        %v628 = vpop.f32.mrb[0].mxu0
        %629 = vmatprep.mubr.f32.mxu0 0.0
        %630 = vmatmul.mubr.f32.gmra.mrb[0].mxu0 %v553
        %v631 = vpop.f32.mrb[0].mxu0
        %v632 = vadd.f32 0.0, %v631
        %v633 = vpop.f32.mrb[0].mxu0
        %634 = vmatprep.mubr.f32.mxu0 0.0
        %635 = vmatmul.mubr.f32.gmra.mrb[0].mxu0 %v554
        %v636 = vpop.f32.mrb[0].mxu0
        %v637 = vadd.f32 0.0, %v636
        %v638 = vpop.f32.mrb[0].mxu0
        %639 = vmatprep.mubr.f32.mxu0 0.0
        %640 = vmatmul.mubr.f32.gmra.mrb[0].mxu0 %v555
        %v641 = vpop.f32.mrb[0].mxu0
        %v642 = vadd.f32 0.0, %v641
        %v643 = vpop.f32.mrb[0].mxu0
        %644 = vmatprep.mubr.f32.mxu0 0.0
        %645 = vmatmul.mubr.f32.gmra.mrb[0].mxu0 %v556
        %v646 = vpop.f32.mrb[0].mxu0
        %v647 = vadd.f32 0.0, %v646
        %v648 = vpop.f32.mrb[0].mxu0
        %649 = vmatprep.mubr.f32.mxu0 0.0
        %650 = vmatmul.mubr.f32.gmra.mrb[0].mxu0 %v557
        %v651 = vpop.f32.mrb[0].mxu0
        %v652 = vadd.f32 0.0, %v651
        %v653 = vpop.f32.mrb[0].mxu0
        %654 = vmatprep.mubr.f32.mxu0 0.0
        %655 = vmatmul.mubr.f32.gmra.mrb[0].mxu0 %v558
        %v656 = vpop.f32.mrb[0].mxu0
        %v657 = vadd.f32 0.0, %v656
        %v658 = vpop.f32.mrb[0].mxu0
        %659 = vmatprep.mubr.f32.mxu0 0.0
        %660 = vmatmul.mubr.f32.gmra.mrb[0].mxu0 %v559
        %v661 = vpop.f32.mrb[0].mxu0
        %v662 = vadd.f32 0.0, %v661
        %v663 = vpop.f32.mrb[0].mxu0
        %664 = vdwg.mxu0
        %v665 = vmul.f32 %v627, 0.015625
        %v666 = vmul.f32 %v632, 0.015625
        %v667 = vmul.f32 %v637, 0.015625
        %v668 = vmul.f32 %v642, 0.015625
        %v669 = vmul.f32 %v647, 0.015625
        %v670 = vmul.f32 %v652, 0.015625
        %v671 = vmul.f32 %v657, 0.015625
        %v672 = vmul.f32 %v662, 0.015625
        %v673 = vadd.f32 %v665, 1e-05
        %v674 = vadd.f32 %v666, 1e-05
        %v675 = vadd.f32 %v667, 1e-05
        %v676 = vadd.f32 %v668, 1e-05
        %v677 = vadd.f32 %v669, 1e-05
        %v678 = vadd.f32 %v670, 1e-05
        %v679 = vadd.f32 %v671, 1e-05
        %v680 = vadd.f32 %v672, 1e-05
        %v681 = vrsqrt.pop %v673
        %v682 = vrsqrt.pop %v674
        %v683 = vrsqrt.pop %v675
        %v684 = vrsqrt.pop %v676
        %v685 = vrsqrt.pop %v677
        %v686 = vrsqrt.pop %v678
        %v687 = vrsqrt.pop %v679
        %v688 = vrsqrt.pop %v680
        %v689 = vmul.f32 %v520, %v681
        %v690 = vmul.f32 %v521, %v682
        %v691 = vmul.f32 %v522, %v683
        %v692 = vmul.f32 %v523, %v684
        %v693 = vmul.f32 %v524, %v685
        %v694 = vmul.f32 %v525, %v686
        %v695 = vmul.f32 %v526, %v687
        %v696 = vmul.f32 %v527, %v688
        %v697 = vlaneseq
        %v698 = vshrl.u32 %v697, 7
        %v699 = vsub.s32 0, %v698
        %v700 = vrot.slane %v348, %v699
        %v701 = vmul.f32 %v689, %v700
        %v702 = vmul.f32 %v690, %v700
        %v703 = vmul.f32 %v691, %v700
        %v704 = vmul.f32 %v692, %v700
        %v705 = vmul.f32 %v693, %v700
        %v706 = vmul.f32 %v694, %v700
        %v707 = vmul.f32 %v695, %v700
        %v708 = vmul.f32 %v696, %v700
        %v709 = vlaneseq
        %v710 = vshrl.u32 %v709, 7
        %v711 = vsub.s32 2, %v710
        %v712 = vrot.slane %v348, %v711
        %v713 = vadd.f32 %v701, %v712
        %v714 = vadd.f32 %v702, %v712
        %v715 = vadd.f32 %v703, %v712
        %v716 = vadd.f32 %v704, %v712
        %v717 = vadd.f32 %v705, %v712
        %v718 = vadd.f32 %v706, %v712
        %v719 = vadd.f32 %v707, %v712
        %v720 = vadd.f32 %v708, %v712
        %v721 = vmul.f32 %v528, %v681
        %v722 = vmul.f32 %v529, %v682
        %v723 = vmul.f32 %v530, %v683
        %v724 = vmul.f32 %v531, %v684
        %v725 = vmul.f32 %v532, %v685
        %v726 = vmul.f32 %v533, %v686
        %v727 = vmul.f32 %v534, %v687
        %v728 = vmul.f32 %v535, %v688
        %v729 = vlaneseq
        %v730 = vshrl.u32 %v729, 7
        %v731 = vsub.s32 1, %v730
        %v732 = vrot.slane %v348, %v731
        %v733 = vmul.f32 %v721, %v732
        %v734 = vmul.f32 %v722, %v732
        %v735 = vmul.f32 %v723, %v732
        %v736 = vmul.f32 %v724, %v732
        %v737 = vmul.f32 %v725, %v732
        %v738 = vmul.f32 %v726, %v732
        %v739 = vmul.f32 %v727, %v732
        %v740 = vmul.f32 %v728, %v732
        %v741 = vlaneseq
        %v742 = vshrl.u32 %v741, 7
        %v743 = vsub.s32 3, %v742
        %v744 = vrot.slane %v348, %v743
        %v745 = vadd.f32 %v733, %v744
        %v746 = vadd.f32 %v734, %v744
        %v747 = vadd.f32 %v735, %v744
        %v748 = vadd.f32 %v736, %v744
        %v749 = vadd.f32 %v737, %v744
        %v750 = vadd.f32 %v738, %v744
        %v751 = vadd.f32 %v739, %v744
        %v752 = vadd.f32 %v740, %v744
        %v753 = vld [vmem:[#allocation10] sm:$0xff]
        %v754 = vld [vmem:[#allocation10 + $0x8] sm:$0xff]
        %v755 = vld [vmem:[#allocation10 + $0x10] sm:$0xff]
        %v756 = vld [vmem:[#allocation10 + $0x18] sm:$0xff]
        %v757 = vld [vmem:[#allocation10 + $0x20] sm:$0xff]
        %v758 = vld [vmem:[#allocation10 + $0x28] sm:$0xff]
        %v759 = vld [vmem:[#allocation10 + $0x30] sm:$0xff]
        %v760 = vld [vmem:[#allocation10 + $0x38] sm:$0xff]
        %v761 = vld [vmem:[#allocation10 + $0x40] sm:$0xff]
        %v762 = vld [vmem:[#allocation10 + $0x48] sm:$0xff]
        %v763 = vld [vmem:[#allocation10 + $0x50] sm:$0xff]
        %v764 = vld [vmem:[#allocation10 + $0x58] sm:$0xff]
        %v765 = vld [vmem:[#allocation10 + $0x60] sm:$0xff]
        %v766 = vld [vmem:[#allocation10 + $0x68] sm:$0xff]
        %v767 = vld [vmem:[#allocation10 + $0x70] sm:$0xff]
        %v768 = vld [vmem:[#allocation10 + $0x78] sm:$0xff]
        %s769 = scalar_lea.vmem [#allocation10], 128
        %v770 = vld [vmem:[%s769] sm:$0xff]
        %v771 = vld [vmem:[%s769 + $0x8] sm:$0xff]
        %v772 = vld [vmem:[%s769 + $0x10] sm:$0xff]
        %v773 = vld [vmem:[%s769 + $0x18] sm:$0xff]
        %v774 = vld [vmem:[%s769 + $0x20] sm:$0xff]
        %v775 = vld [vmem:[%s769 + $0x28] sm:$0xff]
        %v776 = vld [vmem:[%s769 + $0x30] sm:$0xff]
        %v777 = vld [vmem:[%s769 + $0x38] sm:$0xff]
        %v778 = vld [vmem:[%s769 + $0x40] sm:$0xff]
        %v779 = vld [vmem:[%s769 + $0x48] sm:$0xff]
        %v780 = vld [vmem:[%s769 + $0x50] sm:$0xff]
        %v781 = vld [vmem:[%s769 + $0x58] sm:$0xff]
        %v782 = vld [vmem:[%s769 + $0x60] sm:$0xff]
        %v783 = vld [vmem:[%s769 + $0x68] sm:$0xff]
        %v784 = vld [vmem:[%s769 + $0x70] sm:$0xff]
        %v785 = vld [vmem:[%s769 + $0x78] sm:$0xff]
        %786 = vmatprep.subr.mxu0 0.0
        %787 = vmatpush1.msra.mxu0 %v770
        %788 = vmatprep.subr.mxu0 0.0
        %789 = vmatpush1.msra.mxu0 %v771
        %790 = vmatprep.subr.mxu0 0.0
        %791 = vmatpush1.msra.mxu0 %v772
        %792 = vmatprep.subr.mxu0 0.0
        %793 = vmatpush1.msra.mxu0 %v773
        %794 = vmatprep.subr.mxu0 0.0
        %795 = vmatpush1.msra.mxu0 %v774
        %796 = vmatprep.subr.mxu0 0.0
        %797 = vmatpush1.msra.mxu0 %v775
        %798 = vmatprep.subr.mxu0 0.0
        %799 = vmatpush1.msra.mxu0 %v776
        %800 = vmatprep.subr.mxu0 0.0
        %801 = vmatpush1.msra.mxu0 %v777
        %802 = vmatprep.subr.mxu0 0.0
        %803 = vmatpush1.msra.mxu0 %v778
        %804 = vmatprep.subr.mxu0 0.0
        %805 = vmatpush1.msra.mxu0 %v779
        %806 = vmatprep.subr.mxu0 0.0
        %807 = vmatpush1.msra.mxu0 %v780
        %808 = vmatprep.subr.mxu0 0.0
        %809 = vmatpush1.msra.mxu0 %v781
        %810 = vmatprep.subr.mxu0 0.0
        %811 = vmatpush1.msra.mxu0 %v782
        %812 = vmatprep.subr.mxu0 0.0
        %813 = vmatpush1.msra.mxu0 %v783
        %814 = vmatprep.subr.mxu0 0.0
        %815 = vmatpush1.msra.mxu0 %v784
        %816 = vmatprep.subr.mxu0 0.0
        %817 = vmatpush1.msra.mxu0 %v785
        %818 = vmatprep.subr.mxu0 0.0
        %819 = vmatpush1.msra.mxu0 0.0
        %820 = vmatprep.subr.mxu0 0.0
        %821 = vmatpush1.msra.mxu0 0.0
        %822 = vmatprep.subr.mxu0 0.0
        %823 = vmatpush1.msra.mxu0 0.0
        %824 = vmatprep.subr.mxu0 0.0
        %825 = vmatpush1.msra.mxu0 0.0
        %826 = vmatprep.subr.mxu0 0.0
        %827 = vmatpush1.msra.mxu0 0.0
        %828 = vmatprep.subr.mxu0 0.0
        %829 = vmatpush1.msra.mxu0 0.0
        %830 = vmatprep.subr.mxu0 0.0
        %831 = vmatpush1.msra.mxu0 0.0
        %832 = vmatprep.subr.mxu0 0.0
        %833 = vmatpush1.msra.mxu0 0.0
        %834 = vmatprep.subr.mxu0 0.0
        %835 = vmatpush1.msra.mxu0 0.0
        %836 = vmatprep.subr.mxu0 0.0
        %837 = vmatpush1.msra.mxu0 0.0
        %838 = vmatprep.subr.mxu0 0.0
        %839 = vmatpush1.msra.mxu0 0.0
        %840 = vmatprep.subr.mxu0 0.0
        %841 = vmatpush1.msra.mxu0 0.0
        %842 = vmatprep.subr.mxu0 0.0
        %843 = vmatpush1.msra.mxu0 0.0
        %844 = vmatprep.subr.mxu0 0.0
        %845 = vmatpush1.msra.mxu0 0.0
        %846 = vmatprep.subr.mxu0 0.0
        %847 = vmatpush1.msra.mxu0 0.0
        %848 = vmatprep.subr.mxu0 0.0
        %849 = vmatpush1.msra.mxu0 0.0
        %850 = vmatprep.mubr.f32.mxu0 0.0
        %851 = vmatmul.mubr.f32.gmra.mrb[0].mxu0 %v745
        %v852 = vpop.f32.mrb[0].mxu0
        %v853 = vadd.f32 0.0, %v852
        %v854 = vpop.f32.mrb[0].mxu0
        %855 = vmatprep.mubr.f32.mxu0 0.0
        %856 = vmatmul.mubr.f32.gmra.mrb[0].mxu0 %v746
        %v857 = vpop.f32.mrb[0].mxu0
        %v858 = vadd.f32 0.0, %v857
        %v859 = vpop.f32.mrb[0].mxu0
        %860 = vmatprep.mubr.f32.mxu0 0.0
        %861 = vmatmul.mubr.f32.gmra.mrb[0].mxu0 %v747
        %v862 = vpop.f32.mrb[0].mxu0
        %v863 = vadd.f32 0.0, %v862
        %v864 = vpop.f32.mrb[0].mxu0
        %865 = vmatprep.mubr.f32.mxu0 0.0
        %866 = vmatmul.mubr.f32.gmra.mrb[0].mxu0 %v748
        %v867 = vpop.f32.mrb[0].mxu0
        %v868 = vadd.f32 0.0, %v867
        %v869 = vpop.f32.mrb[0].mxu0
        %870 = vmatprep.mubr.f32.mxu0 0.0
        %871 = vmatmul.mubr.f32.gmra.mrb[0].mxu0 %v749
        %v872 = vpop.f32.mrb[0].mxu0
        %v873 = vadd.f32 0.0, %v872
        %v874 = vpop.f32.mrb[0].mxu0
        %875 = vmatprep.mubr.f32.mxu0 0.0
        %876 = vmatmul.mubr.f32.gmra.mrb[0].mxu0 %v750
        %v877 = vpop.f32.mrb[0].mxu0
        %v878 = vadd.f32 0.0, %v877
        %v879 = vpop.f32.mrb[0].mxu0
        %880 = vmatprep.mubr.f32.mxu0 0.0
        %881 = vmatmul.mubr.f32.gmra.mrb[0].mxu0 %v751
        %v882 = vpop.f32.mrb[0].mxu0
        %v883 = vadd.f32 0.0, %v882
        %v884 = vpop.f32.mrb[0].mxu0
        %885 = vmatprep.mubr.f32.mxu0 0.0
        %886 = vmatmul.mubr.f32.gmra.mrb[0].mxu0 %v752
        %v887 = vpop.f32.mrb[0].mxu0
        %v888 = vadd.f32 0.0, %v887
        %v889 = vpop.f32.mrb[0].mxu0
        %890 = vdwg.mxu0
        %891 = vmatprep.subr.mxu0 0.0
        %892 = vmatpush1.msra.mxu0 %v753
        %893 = vmatprep.subr.mxu0 0.0
        %894 = vmatpush1.msra.mxu0 %v754
        %895 = vmatprep.subr.mxu0 0.0
        %896 = vmatpush1.msra.mxu0 %v755
        %897 = vmatprep.subr.mxu0 0.0
        %898 = vmatpush1.msra.mxu0 %v756
        %899 = vmatprep.subr.mxu0 0.0
        %900 = vmatpush1.msra.mxu0 %v757
        %901 = vmatprep.subr.mxu0 0.0
        %902 = vmatpush1.msra.mxu0 %v758
        %903 = vmatprep.subr.mxu0 0.0
        %904 = vmatpush1.msra.mxu0 %v759
        %905 = vmatprep.subr.mxu0 0.0
        %906 = vmatpush1.msra.mxu0 %v760
        %907 = vmatprep.subr.mxu0 0.0
        %908 = vmatpush1.msra.mxu0 %v761
        %909 = vmatprep.subr.mxu0 0.0
        %910 = vmatpush1.msra.mxu0 %v762
        %911 = vmatprep.subr.mxu0 0.0
        %912 = vmatpush1.msra.mxu0 %v763
        %913 = vmatprep.subr.mxu0 0.0
        %914 = vmatpush1.msra.mxu0 %v764
        %915 = vmatprep.subr.mxu0 0.0
        %916 = vmatpush1.msra.mxu0 %v765
        %917 = vmatprep.subr.mxu0 0.0
        %918 = vmatpush1.msra.mxu0 %v766
        %919 = vmatprep.subr.mxu0 0.0
        %920 = vmatpush1.msra.mxu0 %v767
        %921 = vmatprep.subr.mxu0 0.0
        %922 = vmatpush1.msra.mxu0 %v768
        %923 = vmatprep.subr.mxu0 0.0
        %924 = vmatpush1.msra.mxu0 0.0
        %925 = vmatprep.subr.mxu0 0.0
        %926 = vmatpush1.msra.mxu0 0.0
        %927 = vmatprep.subr.mxu0 0.0
        %928 = vmatpush1.msra.mxu0 0.0
        %929 = vmatprep.subr.mxu0 0.0
        %930 = vmatpush1.msra.mxu0 0.0
        %931 = vmatprep.subr.mxu0 0.0
        %932 = vmatpush1.msra.mxu0 0.0
        %933 = vmatprep.subr.mxu0 0.0
        %934 = vmatpush1.msra.mxu0 0.0
        %935 = vmatprep.subr.mxu0 0.0
        %936 = vmatpush1.msra.mxu0 0.0
        %937 = vmatprep.subr.mxu0 0.0
        %938 = vmatpush1.msra.mxu0 0.0
        %939 = vmatprep.subr.mxu0 0.0
        %940 = vmatpush1.msra.mxu0 0.0
        %941 = vmatprep.subr.mxu0 0.0
        %942 = vmatpush1.msra.mxu0 0.0
        %943 = vmatprep.subr.mxu0 0.0
        %944 = vmatpush1.msra.mxu0 0.0
        %945 = vmatprep.subr.mxu0 0.0
        %946 = vmatpush1.msra.mxu0 0.0
        %947 = vmatprep.subr.mxu0 0.0
        %948 = vmatpush1.msra.mxu0 0.0
        %949 = vmatprep.subr.mxu0 0.0
        %950 = vmatpush1.msra.mxu0 0.0
        %951 = vmatprep.subr.mxu0 0.0
        %952 = vmatpush1.msra.mxu0 0.0
        %953 = vmatprep.subr.mxu0 0.0
        %954 = vmatpush1.msra.mxu0 0.0
        %955 = vmatprep.mubr.f32.mxu0 0.0
        %956 = vmatmul.mubr.f32.gmra.mrb[0].mxu0 %v713
        %v957 = vpop.f32.mrb[0].mxu0
        %v958 = vadd.f32 %v853, %v957
        %v959 = vpop.f32.mrb[0].mxu0
        %960 = vmatprep.mubr.f32.mxu0 0.0
        %961 = vmatmul.mubr.f32.gmra.mrb[0].mxu0 %v714
        %v962 = vpop.f32.mrb[0].mxu0
        %v963 = vadd.f32 %v858, %v962
        %v964 = vpop.f32.mrb[0].mxu0
        %965 = vmatprep.mubr.f32.mxu0 0.0
        %966 = vmatmul.mubr.f32.gmra.mrb[0].mxu0 %v715
        %v967 = vpop.f32.mrb[0].mxu0
        %v968 = vadd.f32 %v863, %v967
        %v969 = vpop.f32.mrb[0].mxu0
        %970 = vmatprep.mubr.f32.mxu0 0.0
        %971 = vmatmul.mubr.f32.gmra.mrb[0].mxu0 %v716
        %v972 = vpop.f32.mrb[0].mxu0
        %v973 = vadd.f32 %v868, %v972
        %v974 = vpop.f32.mrb[0].mxu0
        %975 = vmatprep.mubr.f32.mxu0 0.0
        %976 = vmatmul.mubr.f32.gmra.mrb[0].mxu0 %v717
        %v977 = vpop.f32.mrb[0].mxu0
        %v978 = vadd.f32 %v873, %v977
        %v979 = vpop.f32.mrb[0].mxu0
        %980 = vmatprep.mubr.f32.mxu0 0.0
        %981 = vmatmul.mubr.f32.gmra.mrb[0].mxu0 %v718
        %v982 = vpop.f32.mrb[0].mxu0
        %v983 = vadd.f32 %v878, %v982
        %v984 = vpop.f32.mrb[0].mxu0
        %985 = vmatprep.mubr.f32.mxu0 0.0
        %986 = vmatmul.mubr.f32.gmra.mrb[0].mxu0 %v719
        %v987 = vpop.f32.mrb[0].mxu0
        %v988 = vadd.f32 %v883, %v987
        %v989 = vpop.f32.mrb[0].mxu0
        %990 = vmatprep.mubr.f32.mxu0 0.0
        %991 = vmatmul.mubr.f32.gmra.mrb[0].mxu0 %v720
        %v992 = vpop.f32.mrb[0].mxu0
        %v993 = vadd.f32 %v888, %v992
        %v994 = vpop.f32.mrb[0].mxu0
        %995 = vdwg.mxu0
        %v996 = vlaneseq
        %v997 = vshrl.u32 %v996, 7
        %v998 = vsub.s32 4, %v997
        %v999 = vrot.slane %v348, %v998
        %v1000 = vadd.f32 %v958, %v999
        %v1001 = vadd.f32 %v963, %v999
        %v1002 = vadd.f32 %v968, %v999
        %v1003 = vadd.f32 %v973, %v999
        %v1004 = vadd.f32 %v978, %v999
        %v1005 = vadd.f32 %v983, %v999
        %v1006 = vadd.f32 %v988, %v999
        %v1007 = vadd.f32 %v993, %v999
        %vm1008 = vcmp.gt.f32.partialorder %v1000, 0.0
        %vm1009 = vcmp.gt.f32.partialorder %v1001, 0.0
        %vm1010 = vcmp.gt.f32.partialorder %v1002, 0.0
        %vm1011 = vcmp.gt.f32.partialorder %v1003, 0.0
        %vm1012 = vcmp.gt.f32.partialorder %v1004, 0.0
        %vm1013 = vcmp.gt.f32.partialorder %v1005, 0.0
        %vm1014 = vcmp.gt.f32.partialorder %v1006, 0.0
        %vm1015 = vcmp.gt.f32.partialorder %v1007, 0.0
        %v1016 = vmin.f32 %v1000, 0.0
        %v1017 = vmin.f32 %v1001, 0.0
        %v1018 = vmin.f32 %v1002, 0.0
        %v1019 = vmin.f32 %v1003, 0.0
        %v1020 = vmin.f32 %v1004, 0.0
        %v1021 = vmin.f32 %v1005, 0.0
        %v1022 = vmin.f32 %v1006, 0.0
        %v1023 = vmin.f32 %v1007, 0.0
        %v1024 = vmul.f32 %v1016, 1.442695
        %v1025 = vpow.pop %v1024
        %v1026 = vmul.f32 %v1017, 1.442695
        %v1027 = vpow.pop %v1026
        %v1028 = vmul.f32 %v1018, 1.442695
        %v1029 = vpow.pop %v1028
        %v1030 = vmul.f32 %v1019, 1.442695
        %v1031 = vpow.pop %v1030
        %v1032 = vmul.f32 %v1020, 1.442695
        %v1033 = vpow.pop %v1032
        %v1034 = vmul.f32 %v1021, 1.442695
        %v1035 = vpow.pop %v1034
        %v1036 = vmul.f32 %v1022, 1.442695
        %v1037 = vpow.pop %v1036
        %v1038 = vmul.f32 %v1023, 1.442695
        %v1039 = vpow.pop %v1038
        %v1040 = vsub.f32 %v1025, 1.0
        %v1041 = vsub.f32 %v1027, 1.0
        %v1042 = vsub.f32 %v1029, 1.0
        %v1043 = vsub.f32 %v1031, 1.0
        %v1044 = vsub.f32 %v1033, 1.0
        %v1045 = vsub.f32 %v1035, 1.0
        %v1046 = vsub.f32 %v1037, 1.0
        %v1047 = vsub.f32 %v1039, 1.0
        %v1048 = vsel %vm1008, %v1000, %v1040
        %v1049 = vsel %vm1009, %v1001, %v1041
        %v1050 = vsel %vm1010, %v1002, %v1042
        %v1051 = vsel %vm1011, %v1003, %v1043
        %v1052 = vsel %vm1012, %v1004, %v1044
        %v1053 = vsel %vm1013, %v1005, %v1045
        %v1054 = vsel %vm1014, %v1006, %v1046
        %v1055 = vsel %vm1015, %v1007, %v1047
        %s1056 = scalar_lea.vmem [#allocation10], 256
        %v1057 = vld [vmem:[%s1056] sm:$0xff]
        %v1058 = vld [vmem:[%s1056 + $0x8] sm:$0xff]
        %v1059 = vld [vmem:[%s1056 + $0x10] sm:$0xff]
        %v1060 = vld [vmem:[%s1056 + $0x18] sm:$0xff]
        %v1061 = vld [vmem:[%s1056 + $0x20] sm:$0xff]
        %v1062 = vld [vmem:[%s1056 + $0x28] sm:$0xff]
        %v1063 = vld [vmem:[%s1056 + $0x30] sm:$0xff]
        %v1064 = vld [vmem:[%s1056 + $0x38] sm:$0xff]
        %v1065 = vld [vmem:[%s1056 + $0x40] sm:$0xff]
        %v1066 = vld [vmem:[%s1056 + $0x48] sm:$0xff]
        %v1067 = vld [vmem:[%s1056 + $0x50] sm:$0xff]
        %v1068 = vld [vmem:[%s1056 + $0x58] sm:$0xff]
        %v1069 = vld [vmem:[%s1056 + $0x60] sm:$0xff]
        %v1070 = vld [vmem:[%s1056 + $0x68] sm:$0xff]
        %v1071 = vld [vmem:[%s1056 + $0x70] sm:$0xff]
        %v1072 = vld [vmem:[%s1056 + $0x78] sm:$0xff]
        %v1073 = vlaneseq
        %v1074 = vshrl.u32 %v1073, 7
        %v1075 = vsub.s32 5, %v1074
        %v1076 = vrot.slane %v348, %v1075
        %1077 = vmatprep.subr.mxu0 0.0
        %1078 = vmatpush1.msra.mxu0 %v1057
        %1079 = vmatprep.subr.mxu0 0.0
        %1080 = vmatpush1.msra.mxu0 %v1058
        %1081 = vmatprep.subr.mxu0 0.0
        %1082 = vmatpush1.msra.mxu0 %v1059
        %1083 = vmatprep.subr.mxu0 0.0
        %1084 = vmatpush1.msra.mxu0 %v1060
        %1085 = vmatprep.subr.mxu0 0.0
        %1086 = vmatpush1.msra.mxu0 %v1061
        %1087 = vmatprep.subr.mxu0 0.0
        %1088 = vmatpush1.msra.mxu0 %v1062
        %1089 = vmatprep.subr.mxu0 0.0
        %1090 = vmatpush1.msra.mxu0 %v1063
        %1091 = vmatprep.subr.mxu0 0.0
        %1092 = vmatpush1.msra.mxu0 %v1064
        %1093 = vmatprep.subr.mxu0 0.0
        %1094 = vmatpush1.msra.mxu0 %v1065
        %1095 = vmatprep.subr.mxu0 0.0
        %1096 = vmatpush1.msra.mxu0 %v1066
        %1097 = vmatprep.subr.mxu0 0.0
        %1098 = vmatpush1.msra.mxu0 %v1067
        %1099 = vmatprep.subr.mxu0 0.0
        %1100 = vmatpush1.msra.mxu0 %v1068
        %1101 = vmatprep.subr.mxu0 0.0
        %1102 = vmatpush1.msra.mxu0 %v1069
        %1103 = vmatprep.subr.mxu0 0.0
        %1104 = vmatpush1.msra.mxu0 %v1070
        %1105 = vmatprep.subr.mxu0 0.0
        %1106 = vmatpush1.msra.mxu0 %v1071
        %1107 = vmatprep.subr.mxu0 0.0
        %1108 = vmatpush1.msra.mxu0 %v1072
        %1109 = vmatprep.subr.mxu0 0.0
        %1110 = vmatpush1.msra.mxu0 0.0
        %1111 = vmatprep.subr.mxu0 0.0
        %1112 = vmatpush1.msra.mxu0 0.0
        %1113 = vmatprep.subr.mxu0 0.0
        %1114 = vmatpush1.msra.mxu0 0.0
        %1115 = vmatprep.subr.mxu0 0.0
        %1116 = vmatpush1.msra.mxu0 0.0
        %1117 = vmatprep.subr.mxu0 0.0
        %1118 = vmatpush1.msra.mxu0 0.0
        %1119 = vmatprep.subr.mxu0 0.0
        %1120 = vmatpush1.msra.mxu0 0.0
        %1121 = vmatprep.subr.mxu0 0.0
        %1122 = vmatpush1.msra.mxu0 0.0
        %1123 = vmatprep.subr.mxu0 0.0
        %1124 = vmatpush1.msra.mxu0 0.0
        %1125 = vmatprep.subr.mxu0 0.0
        %1126 = vmatpush1.msra.mxu0 0.0
        %1127 = vmatprep.subr.mxu0 0.0
        %1128 = vmatpush1.msra.mxu0 0.0
        %1129 = vmatprep.subr.mxu0 0.0
        %1130 = vmatpush1.msra.mxu0 0.0
        %1131 = vmatprep.subr.mxu0 0.0
        %1132 = vmatpush1.msra.mxu0 0.0
        %1133 = vmatprep.subr.mxu0 0.0
        %1134 = vmatpush1.msra.mxu0 0.0
        %1135 = vmatprep.subr.mxu0 0.0
        %1136 = vmatpush1.msra.mxu0 0.0
        %1137 = vmatprep.subr.mxu0 0.0
        %1138 = vmatpush1.msra.mxu0 0.0
        %1139 = vmatprep.subr.mxu0 0.0
        %1140 = vmatpush1.msra.mxu0 0.0
        %1141 = vmatprep.mubr.f32.mxu0 0.0
        %1142 = vmatmul.mubr.f32.gmra.mrb[0].mxu0 %v1048
        %v1143 = vpop.f32.mrb[0].mxu0
        %v1144 = vadd.f32 %v1076, %v1143
        %v1145 = vpop.f32.mrb[0].mxu0
        %1146 = vmatprep.mubr.f32.mxu0 0.0
        %1147 = vmatmul.mubr.f32.gmra.mrb[0].mxu0 %v1049
        %v1148 = vpop.f32.mrb[0].mxu0
        %v1149 = vadd.f32 %v1076, %v1148
        %v1150 = vpop.f32.mrb[0].mxu0
        %1151 = vmatprep.mubr.f32.mxu0 0.0
        %1152 = vmatmul.mubr.f32.gmra.mrb[0].mxu0 %v1050
        %v1153 = vpop.f32.mrb[0].mxu0
        %v1154 = vadd.f32 %v1076, %v1153
        %v1155 = vpop.f32.mrb[0].mxu0
        %1156 = vmatprep.mubr.f32.mxu0 0.0
        %1157 = vmatmul.mubr.f32.gmra.mrb[0].mxu0 %v1051
        %v1158 = vpop.f32.mrb[0].mxu0
        %v1159 = vadd.f32 %v1076, %v1158
        %v1160 = vpop.f32.mrb[0].mxu0
        %1161 = vmatprep.mubr.f32.mxu0 0.0
        %1162 = vmatmul.mubr.f32.gmra.mrb[0].mxu0 %v1052
        %v1163 = vpop.f32.mrb[0].mxu0
        %v1164 = vadd.f32 %v1076, %v1163
        %v1165 = vpop.f32.mrb[0].mxu0
        %1166 = vmatprep.mubr.f32.mxu0 0.0
        %1167 = vmatmul.mubr.f32.gmra.mrb[0].mxu0 %v1053
        %v1168 = vpop.f32.mrb[0].mxu0
        %v1169 = vadd.f32 %v1076, %v1168
        %v1170 = vpop.f32.mrb[0].mxu0
        %1171 = vmatprep.mubr.f32.mxu0 0.0
        %1172 = vmatmul.mubr.f32.gmra.mrb[0].mxu0 %v1054
        %v1173 = vpop.f32.mrb[0].mxu0
        %v1174 = vadd.f32 %v1076, %v1173
        %v1175 = vpop.f32.mrb[0].mxu0
        %1176 = vmatprep.mubr.f32.mxu0 0.0
        %1177 = vmatmul.mubr.f32.gmra.mrb[0].mxu0 %v1055
        %v1178 = vpop.f32.mrb[0].mxu0
        %v1179 = vadd.f32 %v1076, %v1178
        %v1180 = vpop.f32.mrb[0].mxu0
        %1181 = vdwg.mxu0
        %s1182 = scalar_lea.vmem [#allocation10], 384
        %v1183 = vld [vmem:[%s1182] sm:$0xff]
        %v1184 = vld [vmem:[%s1182 + $0x8] sm:$0xff]
        %v1185 = vld [vmem:[%s1182 + $0x10] sm:$0xff]
        %v1186 = vld [vmem:[%s1182 + $0x18] sm:$0xff]
        %v1187 = vld [vmem:[%s1182 + $0x20] sm:$0xff]
        %v1188 = vld [vmem:[%s1182 + $0x28] sm:$0xff]
        %v1189 = vld [vmem:[%s1182 + $0x30] sm:$0xff]
        %v1190 = vld [vmem:[%s1182 + $0x38] sm:$0xff]
        %v1191 = vld [vmem:[%s1182 + $0x40] sm:$0xff]
        %v1192 = vld [vmem:[%s1182 + $0x48] sm:$0xff]
        %v1193 = vld [vmem:[%s1182 + $0x50] sm:$0xff]
        %v1194 = vld [vmem:[%s1182 + $0x58] sm:$0xff]
        %v1195 = vld [vmem:[%s1182 + $0x60] sm:$0xff]
        %v1196 = vld [vmem:[%s1182 + $0x68] sm:$0xff]
        %v1197 = vld [vmem:[%s1182 + $0x70] sm:$0xff]
        %v1198 = vld [vmem:[%s1182 + $0x78] sm:$0xff]
        %v1199 = vlaneseq
        %v1200 = vshrl.u32 %v1199, 7
        %v1201 = vsub.s32 6, %v1200
        %v1202 = vrot.slane %v348, %v1201
        %1203 = vmatprep.subr.mxu0 0.0
        %1204 = vmatpush1.msra.mxu0 %v1183
        %1205 = vmatprep.subr.mxu0 0.0
        %1206 = vmatpush1.msra.mxu0 %v1184
        %1207 = vmatprep.subr.mxu0 0.0
        %1208 = vmatpush1.msra.mxu0 %v1185
        %1209 = vmatprep.subr.mxu0 0.0
        %1210 = vmatpush1.msra.mxu0 %v1186
        %1211 = vmatprep.subr.mxu0 0.0
        %1212 = vmatpush1.msra.mxu0 %v1187
        %1213 = vmatprep.subr.mxu0 0.0
        %1214 = vmatpush1.msra.mxu0 %v1188
        %1215 = vmatprep.subr.mxu0 0.0
        %1216 = vmatpush1.msra.mxu0 %v1189
        %1217 = vmatprep.subr.mxu0 0.0
        %1218 = vmatpush1.msra.mxu0 %v1190
        %1219 = vmatprep.subr.mxu0 0.0
        %1220 = vmatpush1.msra.mxu0 %v1191
        %1221 = vmatprep.subr.mxu0 0.0
        %1222 = vmatpush1.msra.mxu0 %v1192
        %1223 = vmatprep.subr.mxu0 0.0
        %1224 = vmatpush1.msra.mxu0 %v1193
        %1225 = vmatprep.subr.mxu0 0.0
        %1226 = vmatpush1.msra.mxu0 %v1194
        %1227 = vmatprep.subr.mxu0 0.0
        %1228 = vmatpush1.msra.mxu0 %v1195
        %1229 = vmatprep.subr.mxu0 0.0
        %1230 = vmatpush1.msra.mxu0 %v1196
        %1231 = vmatprep.subr.mxu0 0.0
        %1232 = vmatpush1.msra.mxu0 %v1197
        %1233 = vmatprep.subr.mxu0 0.0
        %1234 = vmatpush1.msra.mxu0 %v1198
        %1235 = vmatprep.subr.mxu0 0.0
        %1236 = vmatpush1.msra.mxu0 0.0
        %1237 = vmatprep.subr.mxu0 0.0
        %1238 = vmatpush1.msra.mxu0 0.0
        %1239 = vmatprep.subr.mxu0 0.0
        %1240 = vmatpush1.msra.mxu0 0.0
        %1241 = vmatprep.subr.mxu0 0.0
        %1242 = vmatpush1.msra.mxu0 0.0
        %1243 = vmatprep.subr.mxu0 0.0
        %1244 = vmatpush1.msra.mxu0 0.0
        %1245 = vmatprep.subr.mxu0 0.0
        %1246 = vmatpush1.msra.mxu0 0.0
        %1247 = vmatprep.subr.mxu0 0.0
        %1248 = vmatpush1.msra.mxu0 0.0
        %1249 = vmatprep.subr.mxu0 0.0
        %1250 = vmatpush1.msra.mxu0 0.0
        %1251 = vmatprep.subr.mxu0 0.0
        %1252 = vmatpush1.msra.mxu0 0.0
        %1253 = vmatprep.subr.mxu0 0.0
        %1254 = vmatpush1.msra.mxu0 0.0
        %1255 = vmatprep.subr.mxu0 0.0
        %1256 = vmatpush1.msra.mxu0 0.0
        %1257 = vmatprep.subr.mxu0 0.0
        %1258 = vmatpush1.msra.mxu0 0.0
        %1259 = vmatprep.subr.mxu0 0.0
        %1260 = vmatpush1.msra.mxu0 0.0
        %1261 = vmatprep.subr.mxu0 0.0
        %1262 = vmatpush1.msra.mxu0 0.0
        %1263 = vmatprep.subr.mxu0 0.0
        %1264 = vmatpush1.msra.mxu0 0.0
        %1265 = vmatprep.subr.mxu0 0.0
        %1266 = vmatpush1.msra.mxu0 0.0
        %1267 = vmatprep.mubr.f32.mxu0 0.0
        %1268 = vmatmul.mubr.f32.gmra.mrb[0].mxu0 %v1048
        %v1269 = vpop.f32.mrb[0].mxu0
        %v1270 = vadd.f32 %v1202, %v1269
        %v1271 = vpop.f32.mrb[0].mxu0
        %1272 = vmatprep.mubr.f32.mxu0 0.0
        %1273 = vmatmul.mubr.f32.gmra.mrb[0].mxu0 %v1049
        %v1274 = vpop.f32.mrb[0].mxu0
        %v1275 = vadd.f32 %v1202, %v1274
        %v1276 = vpop.f32.mrb[0].mxu0
        %1277 = vmatprep.mubr.f32.mxu0 0.0
        %1278 = vmatmul.mubr.f32.gmra.mrb[0].mxu0 %v1050
        %v1279 = vpop.f32.mrb[0].mxu0
        %v1280 = vadd.f32 %v1202, %v1279
        %v1281 = vpop.f32.mrb[0].mxu0
        %1282 = vmatprep.mubr.f32.mxu0 0.0
        %1283 = vmatmul.mubr.f32.gmra.mrb[0].mxu0 %v1051
        %v1284 = vpop.f32.mrb[0].mxu0
        %v1285 = vadd.f32 %v1202, %v1284
        %v1286 = vpop.f32.mrb[0].mxu0
        %1287 = vmatprep.mubr.f32.mxu0 0.0
        %1288 = vmatmul.mubr.f32.gmra.mrb[0].mxu0 %v1052
        %v1289 = vpop.f32.mrb[0].mxu0
        %v1290 = vadd.f32 %v1202, %v1289
        %v1291 = vpop.f32.mrb[0].mxu0
        %1292 = vmatprep.mubr.f32.mxu0 0.0
        %1293 = vmatmul.mubr.f32.gmra.mrb[0].mxu0 %v1053
        %v1294 = vpop.f32.mrb[0].mxu0
        %v1295 = vadd.f32 %v1202, %v1294
        %v1296 = vpop.f32.mrb[0].mxu0
        %1297 = vmatprep.mubr.f32.mxu0 0.0
        %1298 = vmatmul.mubr.f32.gmra.mrb[0].mxu0 %v1054
        %v1299 = vpop.f32.mrb[0].mxu0
        %v1300 = vadd.f32 %v1202, %v1299
        %v1301 = vpop.f32.mrb[0].mxu0
        %1302 = vmatprep.mubr.f32.mxu0 0.0
        %1303 = vmatmul.mubr.f32.gmra.mrb[0].mxu0 %v1055
        %v1304 = vpop.f32.mrb[0].mxu0
        %v1305 = vadd.f32 %v1202, %v1304
        %v1306 = vpop.f32.mrb[0].mxu0
        %1307 = vdwg.mxu0
        %v1308 = vxor.u32 %v1270, 2147483648
        %v1309 = vxor.u32 %v1275, 2147483648
        %v1310 = vxor.u32 %v1280, 2147483648
        %v1311 = vxor.u32 %v1285, 2147483648
        %v1312 = vxor.u32 %v1290, 2147483648
        %v1313 = vxor.u32 %v1295, 2147483648
        %v1314 = vxor.u32 %v1300, 2147483648
        %v1315 = vxor.u32 %v1305, 2147483648
        %v1316 = vmul.f32 %v1308, 1.442695
        %v1317 = vpow.pop %v1316
        %v1318 = vmul.f32 %v1309, 1.442695
        %v1319 = vpow.pop %v1318
        %v1320 = vmul.f32 %v1310, 1.442695
        %v1321 = vpow.pop %v1320
        %v1322 = vmul.f32 %v1311, 1.442695
        %v1323 = vpow.pop %v1322
        %v1324 = vmul.f32 %v1312, 1.442695
        %v1325 = vpow.pop %v1324
        %v1326 = vmul.f32 %v1313, 1.442695
        %v1327 = vpow.pop %v1326
        %v1328 = vmul.f32 %v1314, 1.442695
        %v1329 = vpow.pop %v1328
        %v1330 = vmul.f32 %v1315, 1.442695
        %v1331 = vpow.pop %v1330
        %v1332 = vadd.f32 %v1317, 1.0
        %v1333 = vadd.f32 %v1319, 1.0
        %v1334 = vadd.f32 %v1321, 1.0
        %v1335 = vadd.f32 %v1323, 1.0
        %v1336 = vadd.f32 %v1325, 1.0
        %v1337 = vadd.f32 %v1327, 1.0
        %v1338 = vadd.f32 %v1329, 1.0
        %v1339 = vadd.f32 %v1331, 1.0
        %v1340 = vrcp.pop %v1332
        %v1341 = vmul.f32 1.0, %v1340
        %v1342 = vrcp.pop %v1333
        %v1343 = vmul.f32 1.0, %v1342
        %v1344 = vrcp.pop %v1334
        %v1345 = vmul.f32 1.0, %v1344
        %v1346 = vrcp.pop %v1335
        %v1347 = vmul.f32 1.0, %v1346
        %v1348 = vrcp.pop %v1336
        %v1349 = vmul.f32 1.0, %v1348
        %v1350 = vrcp.pop %v1337
        %v1351 = vmul.f32 1.0, %v1350
        %v1352 = vrcp.pop %v1338
        %v1353 = vmul.f32 1.0, %v1352
        %v1354 = vrcp.pop %v1339
        %v1355 = vmul.f32 1.0, %v1354
        %v1356 = vmul.f32 %v1341, %v1144
        %v1357 = vmul.f32 %v1343, %v1149
        %v1358 = vmul.f32 %v1345, %v1154
        %v1359 = vmul.f32 %v1347, %v1159
        %v1360 = vmul.f32 %v1349, %v1164
        %v1361 = vmul.f32 %v1351, %v1169
        %v1362 = vmul.f32 %v1353, %v1174
        %v1363 = vmul.f32 %v1355, %v1179
        %v1364 = vadd.f32 %v358, %v1356
        %v1365 = vadd.f32 %v359, %v1357
        %v1366 = vadd.f32 %v360, %v1358
        %v1367 = vadd.f32 %v361, %v1359
        %v1368 = vadd.f32 %v362, %v1360
        %v1369 = vadd.f32 %v363, %v1361
        %v1370 = vadd.f32 %v364, %v1362
        %v1371 = vadd.f32 %v365, %v1363
        %v1372 = vld [vmem:[%s283] sm:$0xff]
        %s1373 = scalar_lea.vmem [#allocation10], 512
        %v1374 = vld [vmem:[%s1373] sm:$0xff]
        %v1375 = vld [vmem:[%s1373 + $0x8] sm:$0xff]
        %v1376 = vld [vmem:[%s1373 + $0x10] sm:$0xff]
        %v1377 = vld [vmem:[%s1373 + $0x18] sm:$0xff]
        %v1378 = vld [vmem:[%s1373 + $0x20] sm:$0xff]
        %v1379 = vld [vmem:[%s1373 + $0x28] sm:$0xff]
        %v1380 = vld [vmem:[%s1373 + $0x30] sm:$0xff]
        %v1381 = vld [vmem:[%s1373 + $0x38] sm:$0xff]
        %v1382 = vld [vmem:[%s1373 + $0x40] sm:$0xff]
        %v1383 = vld [vmem:[%s1373 + $0x48] sm:$0xff]
        %v1384 = vld [vmem:[%s1373 + $0x50] sm:$0xff]
        %v1385 = vld [vmem:[%s1373 + $0x58] sm:$0xff]
        %v1386 = vld [vmem:[%s1373 + $0x60] sm:$0xff]
        %v1387 = vld [vmem:[%s1373 + $0x68] sm:$0xff]
        %v1388 = vld [vmem:[%s1373 + $0x70] sm:$0xff]
        %v1389 = vld [vmem:[%s1373 + $0x78] sm:$0xff]
        %1390 = vmatprep.subr.mxu0 0.0
        %1391 = vmatpush1.msra.mxu0 %v1374
        %1392 = vmatprep.subr.mxu0 0.0
        %1393 = vmatpush1.msra.mxu0 %v1375
        %1394 = vmatprep.subr.mxu0 0.0
        %1395 = vmatpush1.msra.mxu0 %v1376
        %1396 = vmatprep.subr.mxu0 0.0
        %1397 = vmatpush1.msra.mxu0 %v1377
        %1398 = vmatprep.subr.mxu0 0.0
        %1399 = vmatpush1.msra.mxu0 %v1378
        %1400 = vmatprep.subr.mxu0 0.0
        %1401 = vmatpush1.msra.mxu0 %v1379
        %1402 = vmatprep.subr.mxu0 0.0
        %1403 = vmatpush1.msra.mxu0 %v1380
        %1404 = vmatprep.subr.mxu0 0.0
        %1405 = vmatpush1.msra.mxu0 %v1381
        %1406 = vmatprep.subr.mxu0 0.0
        %1407 = vmatpush1.msra.mxu0 %v1382
        %1408 = vmatprep.subr.mxu0 0.0
        %1409 = vmatpush1.msra.mxu0 %v1383
        %1410 = vmatprep.subr.mxu0 0.0
        %1411 = vmatpush1.msra.mxu0 %v1384
        %1412 = vmatprep.subr.mxu0 0.0
        %1413 = vmatpush1.msra.mxu0 %v1385
        %1414 = vmatprep.subr.mxu0 0.0
        %1415 = vmatpush1.msra.mxu0 %v1386
        %1416 = vmatprep.subr.mxu0 0.0
        %1417 = vmatpush1.msra.mxu0 %v1387
        %1418 = vmatprep.subr.mxu0 0.0
        %1419 = vmatpush1.msra.mxu0 %v1388
        %1420 = vmatprep.subr.mxu0 0.0
        %1421 = vmatpush1.msra.mxu0 %v1389
        %1422 = vmatprep.subr.mxu0 0.0
        %1423 = vmatpush1.msra.mxu0 0.0
        %1424 = vmatprep.subr.mxu0 0.0
        %1425 = vmatpush1.msra.mxu0 0.0
        %1426 = vmatprep.subr.mxu0 0.0
        %1427 = vmatpush1.msra.mxu0 0.0
        %1428 = vmatprep.subr.mxu0 0.0
        %1429 = vmatpush1.msra.mxu0 0.0
        %1430 = vmatprep.subr.mxu0 0.0
        %1431 = vmatpush1.msra.mxu0 0.0
        %1432 = vmatprep.subr.mxu0 0.0
        %1433 = vmatpush1.msra.mxu0 0.0
        %1434 = vmatprep.subr.mxu0 0.0
        %1435 = vmatpush1.msra.mxu0 0.0
        %1436 = vmatprep.subr.mxu0 0.0
        %1437 = vmatpush1.msra.mxu0 0.0
        %1438 = vmatprep.subr.mxu0 0.0
        %1439 = vmatpush1.msra.mxu0 0.0
        %1440 = vmatprep.subr.mxu0 0.0
        %1441 = vmatpush1.msra.mxu0 0.0
        %1442 = vmatprep.subr.mxu0 0.0
        %1443 = vmatpush1.msra.mxu0 0.0
        %1444 = vmatprep.subr.mxu0 0.0
        %1445 = vmatpush1.msra.mxu0 0.0
        %1446 = vmatprep.subr.mxu0 0.0
        %1447 = vmatpush1.msra.mxu0 0.0
        %1448 = vmatprep.subr.mxu0 0.0
        %1449 = vmatpush1.msra.mxu0 0.0
        %1450 = vmatprep.subr.mxu0 0.0
        %1451 = vmatpush1.msra.mxu0 0.0
        %1452 = vmatprep.subr.mxu0 0.0
        %1453 = vmatpush1.msra.mxu0 0.0
        %1454 = vmatprep.mubr.f32.mxu0 0.0
        %1455 = vmatmul.mubr.f32.gmra.mrb[0].mxu0 %v1372
        %v1456 = vpop.f32.mrb[0].mxu0
        %v1457 = vadd.f32 0.0, %v1456
        %v1458 = vpop.f32.mrb[0].mxu0
        %1459 = vdwg.mxu0
        %s1460 = scalar_lea.vmem [#allocation10], 640
        %v1461 = vld [vmem:[%s1460] sm:$0xff]
        %v1462 = vld [vmem:[%s1460 + $0x8] sm:$0xff]
        %v1463 = vld [vmem:[%s1460 + $0x10] sm:$0xff]
        %v1464 = vld [vmem:[%s1460 + $0x18] sm:$0xff]
        %v1465 = vld [vmem:[%s1460 + $0x20] sm:$0xff]
        %v1466 = vld [vmem:[%s1460 + $0x28] sm:$0xff]
        %v1467 = vld [vmem:[%s1460 + $0x30] sm:$0xff]
        %v1468 = vld [vmem:[%s1460 + $0x38] sm:$0xff]
        %v1469 = vld [vmem:[%s1460 + $0x40] sm:$0xff]
        %v1470 = vld [vmem:[%s1460 + $0x48] sm:$0xff]
        %v1471 = vld [vmem:[%s1460 + $0x50] sm:$0xff]
        %v1472 = vld [vmem:[%s1460 + $0x58] sm:$0xff]
        %v1473 = vld [vmem:[%s1460 + $0x60] sm:$0xff]
        %v1474 = vld [vmem:[%s1460 + $0x68] sm:$0xff]
        %v1475 = vld [vmem:[%s1460 + $0x70] sm:$0xff]
        %v1476 = vld [vmem:[%s1460 + $0x78] sm:$0xff]
        %1477 = vmatprep.subr.mxu0 0.0
        %1478 = vmatpush1.msra.mxu0 %v1461
        %1479 = vmatprep.subr.mxu0 0.0
        %1480 = vmatpush1.msra.mxu0 %v1462
        %1481 = vmatprep.subr.mxu0 0.0
        %1482 = vmatpush1.msra.mxu0 %v1463
        %1483 = vmatprep.subr.mxu0 0.0
        %1484 = vmatpush1.msra.mxu0 %v1464
        %1485 = vmatprep.subr.mxu0 0.0
        %1486 = vmatpush1.msra.mxu0 %v1465
        %1487 = vmatprep.subr.mxu0 0.0
        %1488 = vmatpush1.msra.mxu0 %v1466
        %1489 = vmatprep.subr.mxu0 0.0
        %1490 = vmatpush1.msra.mxu0 %v1467
        %1491 = vmatprep.subr.mxu0 0.0
        %1492 = vmatpush1.msra.mxu0 %v1468
        %1493 = vmatprep.subr.mxu0 0.0
        %1494 = vmatpush1.msra.mxu0 %v1469
        %1495 = vmatprep.subr.mxu0 0.0
        %1496 = vmatpush1.msra.mxu0 %v1470
        %1497 = vmatprep.subr.mxu0 0.0
        %1498 = vmatpush1.msra.mxu0 %v1471
        %1499 = vmatprep.subr.mxu0 0.0
        %1500 = vmatpush1.msra.mxu0 %v1472
        %1501 = vmatprep.subr.mxu0 0.0
        %1502 = vmatpush1.msra.mxu0 %v1473
        %1503 = vmatprep.subr.mxu0 0.0
        %1504 = vmatpush1.msra.mxu0 %v1474
        %1505 = vmatprep.subr.mxu0 0.0
        %1506 = vmatpush1.msra.mxu0 %v1475
        %1507 = vmatprep.subr.mxu0 0.0
        %1508 = vmatpush1.msra.mxu0 %v1476
        %1509 = vmatprep.subr.mxu0 0.0
        %1510 = vmatpush1.msra.mxu0 0.0
        %1511 = vmatprep.subr.mxu0 0.0
        %1512 = vmatpush1.msra.mxu0 0.0
        %1513 = vmatprep.subr.mxu0 0.0
        %1514 = vmatpush1.msra.mxu0 0.0
        %1515 = vmatprep.subr.mxu0 0.0
        %1516 = vmatpush1.msra.mxu0 0.0
        %1517 = vmatprep.subr.mxu0 0.0
        %1518 = vmatpush1.msra.mxu0 0.0
        %1519 = vmatprep.subr.mxu0 0.0
        %1520 = vmatpush1.msra.mxu0 0.0
        %1521 = vmatprep.subr.mxu0 0.0
        %1522 = vmatpush1.msra.mxu0 0.0
        %1523 = vmatprep.subr.mxu0 0.0
        %1524 = vmatpush1.msra.mxu0 0.0
        %1525 = vmatprep.subr.mxu0 0.0
        %1526 = vmatpush1.msra.mxu0 0.0
        %1527 = vmatprep.subr.mxu0 0.0
        %1528 = vmatpush1.msra.mxu0 0.0
        %1529 = vmatprep.subr.mxu0 0.0
        %1530 = vmatpush1.msra.mxu0 0.0
        %1531 = vmatprep.subr.mxu0 0.0
        %1532 = vmatpush1.msra.mxu0 0.0
        %1533 = vmatprep.subr.mxu0 0.0
        %1534 = vmatpush1.msra.mxu0 0.0
        %1535 = vmatprep.subr.mxu0 0.0
        %1536 = vmatpush1.msra.mxu0 0.0
        %1537 = vmatprep.subr.mxu0 0.0
        %1538 = vmatpush1.msra.mxu0 0.0
        %1539 = vmatprep.subr.mxu0 0.0
        %1540 = vmatpush1.msra.mxu0 0.0
        %1541 = vmatprep.mubr.f32.mxu0 0.0
        %1542 = vmatmul.mubr.f32.gmra.mrb[0].mxu0 %v1364
        %v1543 = vpop.f32.mrb[0].mxu0
        %v1544 = vadd.f32 0.0, %v1543
        %v1545 = vpop.f32.mrb[0].mxu0
        %1546 = vmatprep.mubr.f32.mxu0 0.0
        %1547 = vmatmul.mubr.f32.gmra.mrb[0].mxu0 %v1365
        %v1548 = vpop.f32.mrb[0].mxu0
        %v1549 = vadd.f32 0.0, %v1548
        %v1550 = vpop.f32.mrb[0].mxu0
        %1551 = vmatprep.mubr.f32.mxu0 0.0
        %1552 = vmatmul.mubr.f32.gmra.mrb[0].mxu0 %v1366
        %v1553 = vpop.f32.mrb[0].mxu0
        %v1554 = vadd.f32 0.0, %v1553
        %v1555 = vpop.f32.mrb[0].mxu0
        %1556 = vmatprep.mubr.f32.mxu0 0.0
        %1557 = vmatmul.mubr.f32.gmra.mrb[0].mxu0 %v1367
        %v1558 = vpop.f32.mrb[0].mxu0
        %v1559 = vadd.f32 0.0, %v1558
        %v1560 = vpop.f32.mrb[0].mxu0
        %1561 = vmatprep.mubr.f32.mxu0 0.0
        %1562 = vmatmul.mubr.f32.gmra.mrb[0].mxu0 %v1368
        %v1563 = vpop.f32.mrb[0].mxu0
        %v1564 = vadd.f32 0.0, %v1563
        %v1565 = vpop.f32.mrb[0].mxu0
        %1566 = vmatprep.mubr.f32.mxu0 0.0
        %1567 = vmatmul.mubr.f32.gmra.mrb[0].mxu0 %v1369
        %v1568 = vpop.f32.mrb[0].mxu0
        %v1569 = vadd.f32 0.0, %v1568
        %v1570 = vpop.f32.mrb[0].mxu0
        %1571 = vmatprep.mubr.f32.mxu0 0.0
        %1572 = vmatmul.mubr.f32.gmra.mrb[0].mxu0 %v1370
        %v1573 = vpop.f32.mrb[0].mxu0
        %v1574 = vadd.f32 0.0, %v1573
        %v1575 = vpop.f32.mrb[0].mxu0
        %1576 = vmatprep.mubr.f32.mxu0 0.0
        %1577 = vmatmul.mubr.f32.gmra.mrb[0].mxu0 %v1371
        %v1578 = vpop.f32.mrb[0].mxu0
        %v1579 = vadd.f32 0.0, %v1578
        %v1580 = vpop.f32.mrb[0].mxu0
        %1581 = vdwg.mxu0
        %v1583 = vcombine.high %v1457, %v1457
        %v1585 = vunpack.c.l.s4 1966171168
        %v1586 = vunpack.c.0.s8 %v1585
        %v1587 = vlaneseq
        %v1588 = vshrl.u32 %v1587, 7
        %v1589 = vsub.s32 %v1586, %v1588
        %v1590 = vrot.slane %v1457, %v1589
        %v1592 = vunpack.c.l.s4 1966171168
        %v1593 = vunpack.c.0.s8 %v1592
        %v1594 = vlaneseq
        %v1595 = vshrl.u32 %v1594, 7
        %v1596 = vsub.s32 %v1593, %v1595
        %v1597 = vrot.slane %v1583, %v1596
        %v1598 = vcombine.high %v1590, %v1590
        %v1599 = vcombine.high %v1597, %v1597
        %v1601 = vunpack.c.l.s4 1966171168
        %v1602 = vunpack.c.0.s8 %v1601
        %v1603 = vlaneseq
        %v1604 = vshrl.u32 %v1603, 7
        %v1605 = vsub.s32 %v1602, %v1604
        %v1606 = vrot.slane %v1590, %v1605
        %v1608 = vunpack.c.l.s4 1966171168
        %v1609 = vunpack.c.0.s8 %v1608
        %v1610 = vlaneseq
        %v1611 = vshrl.u32 %v1610, 7
        %v1612 = vsub.s32 %v1609, %v1611
        %v1613 = vrot.slane %v1597, %v1612
        %v1615 = vunpack.c.l.s4 1966171168
        %v1616 = vunpack.c.0.s8 %v1615
        %v1617 = vlaneseq
        %v1618 = vshrl.u32 %v1617, 7
        %v1619 = vsub.s32 %v1616, %v1618
        %v1620 = vrot.slane %v1598, %v1619
        %v1622 = vunpack.c.l.s4 1966171168
        %v1623 = vunpack.c.0.s8 %v1622
        %v1624 = vlaneseq
        %v1625 = vshrl.u32 %v1624, 7
        %v1626 = vsub.s32 %v1623, %v1625
        %v1627 = vrot.slane %v1599, %v1626
        %v1628 = vcombine.high %v1606, %v1606
        %v1629 = vcombine.high %v1613, %v1613
        %v1630 = vcombine.high %v1620, %v1620
        %v1631 = vcombine.high %v1627, %v1627
        %v1632 = vlaneseq
        %v1633 = vshrl.u32 %v1632, 7
        %v1634 = vsub.s32 0, %v1633
        %v1635 = vrot.slane %v1606, %v1634
        %v1636 = vlaneseq
        %v1637 = vshrl.u32 %v1636, 7
        %v1638 = vsub.s32 0, %v1637
        %v1639 = vrot.slane %v1620, %v1638
        %v1640 = vlaneseq
        %v1641 = vshrl.u32 %v1640, 7
        %v1642 = vsub.s32 0, %v1641
        %v1643 = vrot.slane %v1628, %v1642
        %v1644 = vlaneseq
        %v1645 = vshrl.u32 %v1644, 7
        %v1646 = vsub.s32 0, %v1645
        %v1647 = vrot.slane %v1630, %v1646
        %v1648 = vlaneseq
        %v1649 = vshrl.u32 %v1648, 7
        %v1650 = vsub.s32 0, %v1649
        %v1651 = vrot.slane %v1613, %v1650
        %v1652 = vlaneseq
        %v1653 = vshrl.u32 %v1652, 7
        %v1654 = vsub.s32 0, %v1653
        %v1655 = vrot.slane %v1627, %v1654
        %v1656 = vlaneseq
        %v1657 = vshrl.u32 %v1656, 7
        %v1658 = vsub.s32 0, %v1657
        %v1659 = vrot.slane %v1629, %v1658
        %v1660 = vlaneseq
        %v1661 = vshrl.u32 %v1660, 7
        %v1662 = vsub.s32 0, %v1661
        %v1663 = vrot.slane %v1631, %v1662
        %v1672 = vmul.f32 %v1635, %v1544
        %v1673 = vmul.f32 %v1639, %v1549
        %v1674 = vmul.f32 %v1643, %v1554
        %v1675 = vmul.f32 %v1647, %v1559
        %v1676 = vmul.f32 %v1651, %v1564
        %v1677 = vmul.f32 %v1655, %v1569
        %v1678 = vmul.f32 %v1659, %v1574
        %v1679 = vmul.f32 %v1663, %v1579
        %s1680 = scalar_lea.vmem [#allocation10], 1280
        %v1681 = vld [vmem:[%s1680] sm:$0xff]
        %v1682 = vld [vmem:[%s1680 + $0x8] sm:$0xff]
        %v1683 = vld [vmem:[%s1680 + $0x10] sm:$0xff]
        %v1684 = vld [vmem:[%s1680 + $0x18] sm:$0xff]
        %v1685 = vld [vmem:[%s1680 + $0x20] sm:$0xff]
        %v1686 = vld [vmem:[%s1680 + $0x28] sm:$0xff]
        %v1687 = vld [vmem:[%s1680 + $0x30] sm:$0xff]
        %v1688 = vld [vmem:[%s1680 + $0x38] sm:$0xff]
        %v1689 = vld [vmem:[%s1680 + $0x40] sm:$0xff]
        %v1690 = vld [vmem:[%s1680 + $0x48] sm:$0xff]
        %v1691 = vld [vmem:[%s1680 + $0x50] sm:$0xff]
        %v1692 = vld [vmem:[%s1680 + $0x58] sm:$0xff]
        %v1693 = vld [vmem:[%s1680 + $0x60] sm:$0xff]
        %v1694 = vld [vmem:[%s1680 + $0x68] sm:$0xff]
        %v1695 = vld [vmem:[%s1680 + $0x70] sm:$0xff]
        %v1696 = vld [vmem:[%s1680 + $0x78] sm:$0xff]
        %1697 = vmatprep.subr.mxu0 0.0
        %1698 = vmatpush1.msra.mxu0 %v1681
        %1699 = vmatprep.subr.mxu0 0.0
        %1700 = vmatpush1.msra.mxu0 %v1682
        %1701 = vmatprep.subr.mxu0 0.0
        %1702 = vmatpush1.msra.mxu0 %v1683
        %1703 = vmatprep.subr.mxu0 0.0
        %1704 = vmatpush1.msra.mxu0 %v1684
        %1705 = vmatprep.subr.mxu0 0.0
        %1706 = vmatpush1.msra.mxu0 %v1685
        %1707 = vmatprep.subr.mxu0 0.0
        %1708 = vmatpush1.msra.mxu0 %v1686
        %1709 = vmatprep.subr.mxu0 0.0
        %1710 = vmatpush1.msra.mxu0 %v1687
        %1711 = vmatprep.subr.mxu0 0.0
        %1712 = vmatpush1.msra.mxu0 %v1688
        %1713 = vmatprep.subr.mxu0 0.0
        %1714 = vmatpush1.msra.mxu0 %v1689
        %1715 = vmatprep.subr.mxu0 0.0
        %1716 = vmatpush1.msra.mxu0 %v1690
        %1717 = vmatprep.subr.mxu0 0.0
        %1718 = vmatpush1.msra.mxu0 %v1691
        %1719 = vmatprep.subr.mxu0 0.0
        %1720 = vmatpush1.msra.mxu0 %v1692
        %1721 = vmatprep.subr.mxu0 0.0
        %1722 = vmatpush1.msra.mxu0 %v1693
        %1723 = vmatprep.subr.mxu0 0.0
        %1724 = vmatpush1.msra.mxu0 %v1694
        %1725 = vmatprep.subr.mxu0 0.0
        %1726 = vmatpush1.msra.mxu0 %v1695
        %1727 = vmatprep.subr.mxu0 0.0
        %1728 = vmatpush1.msra.mxu0 %v1696
        %1729 = vmatprep.subr.mxu0 0.0
        %1730 = vmatpush1.msra.mxu0 0.0
        %1731 = vmatprep.subr.mxu0 0.0
        %1732 = vmatpush1.msra.mxu0 0.0
        %1733 = vmatprep.subr.mxu0 0.0
        %1734 = vmatpush1.msra.mxu0 0.0
        %1735 = vmatprep.subr.mxu0 0.0
        %1736 = vmatpush1.msra.mxu0 0.0
        %1737 = vmatprep.subr.mxu0 0.0
        %1738 = vmatpush1.msra.mxu0 0.0
        %1739 = vmatprep.subr.mxu0 0.0
        %1740 = vmatpush1.msra.mxu0 0.0
        %1741 = vmatprep.subr.mxu0 0.0
        %1742 = vmatpush1.msra.mxu0 0.0
        %1743 = vmatprep.subr.mxu0 0.0
        %1744 = vmatpush1.msra.mxu0 0.0
        %1745 = vmatprep.subr.mxu0 0.0
        %1746 = vmatpush1.msra.mxu0 0.0
        %1747 = vmatprep.subr.mxu0 0.0
        %1748 = vmatpush1.msra.mxu0 0.0
        %1749 = vmatprep.subr.mxu0 0.0
        %1750 = vmatpush1.msra.mxu0 0.0
        %1751 = vmatprep.subr.mxu0 0.0
        %1752 = vmatpush1.msra.mxu0 0.0
        %1753 = vmatprep.subr.mxu0 0.0
        %1754 = vmatpush1.msra.mxu0 0.0
        %1755 = vmatprep.subr.mxu0 0.0
        %1756 = vmatpush1.msra.mxu0 0.0
        %1757 = vmatprep.subr.mxu0 0.0
        %1758 = vmatpush1.msra.mxu0 0.0
        %1759 = vmatprep.subr.mxu0 0.0
        %1760 = vmatpush1.msra.mxu0 0.0
        %1761 = vmatprep.mubr.f32.mxu0 0.0
        %1762 = vmatmul.mubr.f32.gmra.mrb[0].mxu0 %v1672
        %v1763 = vpop.f32.mrb[0].mxu0
        %v1764 = vadd.f32 0.0, %v1763
        %v1765 = vpop.f32.mrb[0].mxu0
        %1766 = vmatprep.mubr.f32.mxu0 0.0
        %1767 = vmatmul.mubr.f32.gmra.mrb[0].mxu0 %v1673
        %v1768 = vpop.f32.mrb[0].mxu0
        %v1769 = vadd.f32 0.0, %v1768
        %v1770 = vpop.f32.mrb[0].mxu0
        %1771 = vmatprep.mubr.f32.mxu0 0.0
        %1772 = vmatmul.mubr.f32.gmra.mrb[0].mxu0 %v1674
        %v1773 = vpop.f32.mrb[0].mxu0
        %v1774 = vadd.f32 0.0, %v1773
        %v1775 = vpop.f32.mrb[0].mxu0
        %1776 = vmatprep.mubr.f32.mxu0 0.0
        %1777 = vmatmul.mubr.f32.gmra.mrb[0].mxu0 %v1675
        %v1778 = vpop.f32.mrb[0].mxu0
        %v1779 = vadd.f32 0.0, %v1778
        %v1780 = vpop.f32.mrb[0].mxu0
        %1781 = vmatprep.mubr.f32.mxu0 0.0
        %1782 = vmatmul.mubr.f32.gmra.mrb[0].mxu0 %v1676
        %v1783 = vpop.f32.mrb[0].mxu0
        %v1784 = vadd.f32 0.0, %v1783
        %v1785 = vpop.f32.mrb[0].mxu0
        %1786 = vmatprep.mubr.f32.mxu0 0.0
        %1787 = vmatmul.mubr.f32.gmra.mrb[0].mxu0 %v1677
        %v1788 = vpop.f32.mrb[0].mxu0
        %v1789 = vadd.f32 0.0, %v1788
        %v1790 = vpop.f32.mrb[0].mxu0
        %1791 = vmatprep.mubr.f32.mxu0 0.0
        %1792 = vmatmul.mubr.f32.gmra.mrb[0].mxu0 %v1678
        %v1793 = vpop.f32.mrb[0].mxu0
        %v1794 = vadd.f32 0.0, %v1793
        %v1795 = vpop.f32.mrb[0].mxu0
        %1796 = vmatprep.mubr.f32.mxu0 0.0
        %1797 = vmatmul.mubr.f32.gmra.mrb[0].mxu0 %v1679
        %v1798 = vpop.f32.mrb[0].mxu0
        %v1799 = vadd.f32 0.0, %v1798
        %v1800 = vpop.f32.mrb[0].mxu0
        %1801 = vdwg.mxu0
        %v1802 = vrot.slane %v1764, 4
        %v1803 = vmax.f32 %v1764, %v1802
        %v1804 = vrot.slane %v1803, 2
        %v1805 = vmax.f32 %v1803, %v1804
        %v1806 = vrot.slane %v1805, 1
        %v1807 = vmax.f32 %v1805, %v1806
        %v1808 = vrot.slane %v1769, 4
        %v1809 = vmax.f32 %v1769, %v1808
        %v1810 = vrot.slane %v1809, 2
        %v1811 = vmax.f32 %v1809, %v1810
        %v1812 = vrot.slane %v1811, 1
        %v1813 = vmax.f32 %v1811, %v1812
        %v1814 = vrot.slane %v1774, 4
        %v1815 = vmax.f32 %v1774, %v1814
        %v1816 = vrot.slane %v1815, 2
        %v1817 = vmax.f32 %v1815, %v1816
        %v1818 = vrot.slane %v1817, 1
        %v1819 = vmax.f32 %v1817, %v1818
        %v1820 = vrot.slane %v1779, 4
        %v1821 = vmax.f32 %v1779, %v1820
        %v1822 = vrot.slane %v1821, 2
        %v1823 = vmax.f32 %v1821, %v1822
        %v1824 = vrot.slane %v1823, 1
        %v1825 = vmax.f32 %v1823, %v1824
        %v1826 = vrot.slane %v1784, 4
        %v1827 = vmax.f32 %v1784, %v1826
        %v1828 = vrot.slane %v1827, 2
        %v1829 = vmax.f32 %v1827, %v1828
        %v1830 = vrot.slane %v1829, 1
        %v1831 = vmax.f32 %v1829, %v1830
        %v1832 = vrot.slane %v1789, 4
        %v1833 = vmax.f32 %v1789, %v1832
        %v1834 = vrot.slane %v1833, 2
        %v1835 = vmax.f32 %v1833, %v1834
        %v1836 = vrot.slane %v1835, 1
        %v1837 = vmax.f32 %v1835, %v1836
        %v1838 = vrot.slane %v1794, 4
        %v1839 = vmax.f32 %v1794, %v1838
        %v1840 = vrot.slane %v1839, 2
        %v1841 = vmax.f32 %v1839, %v1840
        %v1842 = vrot.slane %v1841, 1
        %v1843 = vmax.f32 %v1841, %v1842
        %v1844 = vrot.slane %v1799, 4
        %v1845 = vmax.f32 %v1799, %v1844
        %v1846 = vrot.slane %v1845, 2
        %v1847 = vmax.f32 %v1845, %v1846
        %v1848 = vrot.slane %v1847, 1
        %v1849 = vmax.f32 %v1847, %v1848
        %v1850 = vsub.f32 %v1764, %v1807
        %v1851 = vsub.f32 %v1769, %v1813
        %v1852 = vsub.f32 %v1774, %v1819
        %v1853 = vsub.f32 %v1779, %v1825
        %v1854 = vsub.f32 %v1784, %v1831
        %v1855 = vsub.f32 %v1789, %v1837
        %v1856 = vsub.f32 %v1794, %v1843
        %v1857 = vsub.f32 %v1799, %v1849
        %v1858 = vmul.f32 %v1850, 1.442695
        %v1859 = vpow.pop %v1858
        %v1860 = vmul.f32 %v1851, 1.442695
        %v1861 = vpow.pop %v1860
        %v1862 = vmul.f32 %v1852, 1.442695
        %v1863 = vpow.pop %v1862
        %v1864 = vmul.f32 %v1853, 1.442695
        %v1865 = vpow.pop %v1864
        %v1866 = vmul.f32 %v1854, 1.442695
        %v1867 = vpow.pop %v1866
        %v1868 = vmul.f32 %v1855, 1.442695
        %v1869 = vpow.pop %v1868
        %v1870 = vmul.f32 %v1856, 1.442695
        %v1871 = vpow.pop %v1870
        %v1872 = vmul.f32 %v1857, 1.442695
        %v1873 = vpow.pop %v1872
        %v1874 = vrot.slane %v1859, 4
        %v1875 = vadd.f32 %v1859, %v1874
        %v1876 = vrot.slane %v1875, 2
        %v1877 = vadd.f32 %v1875, %v1876
        %v1878 = vrot.slane %v1877, 1
        %v1879 = vadd.f32 %v1877, %v1878
        %v1880 = vrot.slane %v1861, 4
        %v1881 = vadd.f32 %v1861, %v1880
        %v1882 = vrot.slane %v1881, 2
        %v1883 = vadd.f32 %v1881, %v1882
        %v1884 = vrot.slane %v1883, 1
        %v1885 = vadd.f32 %v1883, %v1884
        %v1886 = vrot.slane %v1863, 4
        %v1887 = vadd.f32 %v1863, %v1886
        %v1888 = vrot.slane %v1887, 2
        %v1889 = vadd.f32 %v1887, %v1888
        %v1890 = vrot.slane %v1889, 1
        %v1891 = vadd.f32 %v1889, %v1890
        %v1892 = vrot.slane %v1865, 4
        %v1893 = vadd.f32 %v1865, %v1892
        %v1894 = vrot.slane %v1893, 2
        %v1895 = vadd.f32 %v1893, %v1894
        %v1896 = vrot.slane %v1895, 1
        %v1897 = vadd.f32 %v1895, %v1896
        %v1898 = vrot.slane %v1867, 4
        %v1899 = vadd.f32 %v1867, %v1898
        %v1900 = vrot.slane %v1899, 2
        %v1901 = vadd.f32 %v1899, %v1900
        %v1902 = vrot.slane %v1901, 1
        %v1903 = vadd.f32 %v1901, %v1902
        %v1904 = vrot.slane %v1869, 4
        %v1905 = vadd.f32 %v1869, %v1904
        %v1906 = vrot.slane %v1905, 2
        %v1907 = vadd.f32 %v1905, %v1906
        %v1908 = vrot.slane %v1907, 1
        %v1909 = vadd.f32 %v1907, %v1908
        %v1910 = vrot.slane %v1871, 4
        %v1911 = vadd.f32 %v1871, %v1910
        %v1912 = vrot.slane %v1911, 2
        %v1913 = vadd.f32 %v1911, %v1912
        %v1914 = vrot.slane %v1913, 1
        %v1915 = vadd.f32 %v1913, %v1914
        %v1916 = vrot.slane %v1873, 4
        %v1917 = vadd.f32 %v1873, %v1916
        %v1918 = vrot.slane %v1917, 2
        %v1919 = vadd.f32 %v1917, %v1918
        %v1920 = vrot.slane %v1919, 1
        %v1921 = vadd.f32 %v1919, %v1920
        %v1922 = vrcp.pop %v1879
        %v1923 = vrcp.pop %v1885
        %v1924 = vrcp.pop %v1891
        %v1925 = vrcp.pop %v1897
        %v1926 = vrcp.pop %v1903
        %v1927 = vrcp.pop %v1909
        %v1928 = vrcp.pop %v1915
        %v1929 = vrcp.pop %v1921
        %v1930 = vmul.f32 %v1859, %v1922
        %v1931 = vmul.f32 %v1861, %v1923
        %v1932 = vmul.f32 %v1863, %v1924
        %v1933 = vmul.f32 %v1865, %v1925
        %v1934 = vmul.f32 %v1867, %v1926
        %v1935 = vmul.f32 %v1869, %v1927
        %v1936 = vmul.f32 %v1871, %v1928
        %v1937 = vmul.f32 %v1873, %v1929
        %v1938 = vmul.f32 %v1930, %v1364
        %v1939 = vmul.f32 %v1931, %v1365
        %v1940 = vmul.f32 %v1932, %v1366
        %v1941 = vmul.f32 %v1933, %v1367
        %v1942 = vmul.f32 %v1934, %v1368
        %v1943 = vmul.f32 %v1935, %v1369
        %v1944 = vmul.f32 %v1936, %v1370
        %v1945 = vmul.f32 %v1937, %v1371
        %v1946 = vrot.slane %v1938, 4
        %v1947 = vadd.f32 %v1938, %v1946
        %v1948 = vrot.slane %v1947, 2
        %v1949 = vadd.f32 %v1947, %v1948
        %v1950 = vrot.slane %v1949, 1
        %v1951 = vadd.f32 %v1949, %v1950
        %v1952 = vrot.slane %v1939, 4
        %v1953 = vadd.f32 %v1939, %v1952
        %v1954 = vrot.slane %v1953, 2
        %v1955 = vadd.f32 %v1953, %v1954
        %v1956 = vrot.slane %v1955, 1
        %v1957 = vadd.f32 %v1955, %v1956
        %v1958 = vrot.slane %v1940, 4
        %v1959 = vadd.f32 %v1940, %v1958
        %v1960 = vrot.slane %v1959, 2
        %v1961 = vadd.f32 %v1959, %v1960
        %v1962 = vrot.slane %v1961, 1
        %v1963 = vadd.f32 %v1961, %v1962
        %v1964 = vrot.slane %v1941, 4
        %v1965 = vadd.f32 %v1941, %v1964
        %v1966 = vrot.slane %v1965, 2
        %v1967 = vadd.f32 %v1965, %v1966
        %v1968 = vrot.slane %v1967, 1
        %v1969 = vadd.f32 %v1967, %v1968
        %v1970 = vrot.slane %v1942, 4
        %v1971 = vadd.f32 %v1942, %v1970
        %v1972 = vrot.slane %v1971, 2
        %v1973 = vadd.f32 %v1971, %v1972
        %v1974 = vrot.slane %v1973, 1
        %v1975 = vadd.f32 %v1973, %v1974
        %v1976 = vrot.slane %v1943, 4
        %v1977 = vadd.f32 %v1943, %v1976
        %v1978 = vrot.slane %v1977, 2
        %v1979 = vadd.f32 %v1977, %v1978
        %v1980 = vrot.slane %v1979, 1
        %v1981 = vadd.f32 %v1979, %v1980
        %v1982 = vrot.slane %v1944, 4
        %v1983 = vadd.f32 %v1944, %v1982
        %v1984 = vrot.slane %v1983, 2
        %v1985 = vadd.f32 %v1983, %v1984
        %v1986 = vrot.slane %v1985, 1
        %v1987 = vadd.f32 %v1985, %v1986
        %v1988 = vrot.slane %v1945, 4
        %v1989 = vadd.f32 %v1945, %v1988
        %v1990 = vrot.slane %v1989, 2
        %v1991 = vadd.f32 %v1989, %v1990
        %v1992 = vrot.slane %v1991, 1
        %v1993 = vadd.f32 %v1991, %v1992
        %vm2002 = vcmask 1041409
        %v2003 = vsel %vm2002, %v1957, %v1951
        %vm2004 = vcmask 1042434
        %v2005 = vsel %vm2004, %v1963, %v2003
        %vm2006 = vcmask 1043459
        %v2007 = vsel %vm2006, %v1969, %v2005
        %vm2008 = vcmask 1044484
        %v2009 = vsel %vm2008, %v1975, %v2007
        %vm2010 = vcmask 1045509
        %v2011 = vsel %vm2010, %v1981, %v2009
        %vm2012 = vcmask 1046534
        %v2013 = vsel %vm2012, %v1987, %v2011
        %vm2014 = vcmask 1047559
        %v2015 = vsel %vm2014, %v1993, %v2013
        %2017 = vmatprep.subr.mxu0 0.0
        %2018 = vmatpush1.msra.mxu0 %v391
        %2019 = vmatprep.subr.mxu0 0.0
        %2020 = vmatpush1.msra.mxu0 %v392
        %2021 = vmatprep.subr.mxu0 0.0
        %2022 = vmatpush1.msra.mxu0 %v393
        %2023 = vmatprep.subr.mxu0 0.0
        %2024 = vmatpush1.msra.mxu0 %v394
        %2025 = vmatprep.subr.mxu0 0.0
        %2026 = vmatpush1.msra.mxu0 %v395
        %2027 = vmatprep.subr.mxu0 0.0
        %2028 = vmatpush1.msra.mxu0 %v396
        %2029 = vmatprep.subr.mxu0 0.0
        %2030 = vmatpush1.msra.mxu0 %v397
        %2031 = vmatprep.subr.mxu0 0.0
        %2032 = vmatpush1.msra.mxu0 %v398
        %2033 = vmatprep.subr.mxu0 0.0
        %2034 = vmatpush1.msra.mxu0 %v399
        %2035 = vmatprep.subr.mxu0 0.0
        %2036 = vmatpush1.msra.mxu0 %v400
        %2037 = vmatprep.subr.mxu0 0.0
        %2038 = vmatpush1.msra.mxu0 %v401
        %2039 = vmatprep.subr.mxu0 0.0
        %2040 = vmatpush1.msra.mxu0 %v402
        %2041 = vmatprep.subr.mxu0 0.0
        %2042 = vmatpush1.msra.mxu0 %v403
        %2043 = vmatprep.subr.mxu0 0.0
        %2044 = vmatpush1.msra.mxu0 %v404
        %2045 = vmatprep.subr.mxu0 0.0
        %2046 = vmatpush1.msra.mxu0 %v405
        %2047 = vmatprep.subr.mxu0 0.0
        %2048 = vmatpush1.msra.mxu0 %v406
        %2049 = vmatprep.subr.mxu0 0.0
        %2050 = vmatpush1.msra.mxu0 0.0
        %2051 = vmatprep.subr.mxu0 0.0
        %2052 = vmatpush1.msra.mxu0 0.0
        %2053 = vmatprep.subr.mxu0 0.0
        %2054 = vmatpush1.msra.mxu0 0.0
        %2055 = vmatprep.subr.mxu0 0.0
        %2056 = vmatpush1.msra.mxu0 0.0
        %2057 = vmatprep.subr.mxu0 0.0
        %2058 = vmatpush1.msra.mxu0 0.0
        %2059 = vmatprep.subr.mxu0 0.0
        %2060 = vmatpush1.msra.mxu0 0.0
        %2061 = vmatprep.subr.mxu0 0.0
        %2062 = vmatpush1.msra.mxu0 0.0
        %2063 = vmatprep.subr.mxu0 0.0
        %2064 = vmatpush1.msra.mxu0 0.0
        %2065 = vmatprep.subr.mxu0 0.0
        %2066 = vmatpush1.msra.mxu0 0.0
        %2067 = vmatprep.subr.mxu0 0.0
        %2068 = vmatpush1.msra.mxu0 0.0
        %2069 = vmatprep.subr.mxu0 0.0
        %2070 = vmatpush1.msra.mxu0 0.0
        %2071 = vmatprep.subr.mxu0 0.0
        %2072 = vmatpush1.msra.mxu0 0.0
        %2073 = vmatprep.subr.mxu0 0.0
        %2074 = vmatpush1.msra.mxu0 0.0
        %2075 = vmatprep.subr.mxu0 0.0
        %2076 = vmatpush1.msra.mxu0 0.0
        %2077 = vmatprep.subr.mxu0 0.0
        %2078 = vmatpush1.msra.mxu0 0.0
        %2079 = vmatprep.subr.mxu0 0.0
        %2080 = vmatpush1.msra.mxu0 0.0
        %2081 = vmatprep.mubr.f32.mxu0 0.0
        %2082 = vmatmul.mubr.f32.gmra.mrb[0].mxu0 %v2015
        %v2083 = vpop.f32.mrb[0].mxu0
        %v2084 = vadd.f32 0.0, %v2083
        %v2085 = vpop.f32.mrb[0].mxu0
        %2086 = vdwg.mxu0
        %v2087 = vmul.f32 %v2084, 0.03125
        %v2089 = vrot.slane %v2087, 1
        %v2090 = vrot.slane %v2087, 2
        %v2091 = vrot.slane %v2087, 3
        %v2092 = vrot.slane %v2087, 4
        %v2093 = vrot.slane %v2087, 5
        %v2094 = vrot.slane %v2087, 6
        %v2095 = vrot.slane %v2087, 7
        %v2104 = vsub.f32 %v1951, %v2087
        %v2105 = vsub.f32 %v1957, %v2089
        %v2106 = vsub.f32 %v1963, %v2090
        %v2107 = vsub.f32 %v1969, %v2091
        %v2108 = vsub.f32 %v1975, %v2092
        %v2109 = vsub.f32 %v1981, %v2093
        %v2110 = vsub.f32 %v1987, %v2094
        %v2111 = vsub.f32 %v1993, %v2095
        %v2112 = vmul.f32 %v2104, %v2104
        %v2113 = vmul.f32 %v2105, %v2105
        %v2114 = vmul.f32 %v2106, %v2106
        %v2115 = vmul.f32 %v2107, %v2107
        %v2116 = vmul.f32 %v2108, %v2108
        %v2117 = vmul.f32 %v2109, %v2109
        %v2118 = vmul.f32 %v2110, %v2110
        %v2119 = vmul.f32 %v2111, %v2111
        %v2128 = vrot.slane %v2113, 7
        %v2129 = vsel %vm2002, %v2128, %v2112
        %v2130 = vrot.slane %v2114, 6
        %v2131 = vsel %vm2004, %v2130, %v2129
        %v2132 = vrot.slane %v2115, 5
        %v2133 = vsel %vm2006, %v2132, %v2131
        %v2134 = vrot.slane %v2116, 4
        %v2135 = vsel %vm2008, %v2134, %v2133
        %v2136 = vrot.slane %v2117, 3
        %v2137 = vsel %vm2010, %v2136, %v2135
        %v2138 = vrot.slane %v2118, 2
        %v2139 = vsel %vm2012, %v2138, %v2137
        %v2140 = vrot.slane %v2119, 1
        %v2141 = vsel %vm2014, %v2140, %v2139
        %2143 = vmatprep.subr.mxu0 0.0
        %2144 = vmatpush1.msra.mxu0 %v391
        %2145 = vmatprep.subr.mxu0 0.0
        %2146 = vmatpush1.msra.mxu0 %v392
        %2147 = vmatprep.subr.mxu0 0.0
        %2148 = vmatpush1.msra.mxu0 %v393
        %2149 = vmatprep.subr.mxu0 0.0
        %2150 = vmatpush1.msra.mxu0 %v394
        %2151 = vmatprep.subr.mxu0 0.0
        %2152 = vmatpush1.msra.mxu0 %v395
        %2153 = vmatprep.subr.mxu0 0.0
        %2154 = vmatpush1.msra.mxu0 %v396
        %2155 = vmatprep.subr.mxu0 0.0
        %2156 = vmatpush1.msra.mxu0 %v397
        %2157 = vmatprep.subr.mxu0 0.0
        %2158 = vmatpush1.msra.mxu0 %v398
        %2159 = vmatprep.subr.mxu0 0.0
        %2160 = vmatpush1.msra.mxu0 %v399
        %2161 = vmatprep.subr.mxu0 0.0
        %2162 = vmatpush1.msra.mxu0 %v400
        %2163 = vmatprep.subr.mxu0 0.0
        %2164 = vmatpush1.msra.mxu0 %v401
        %2165 = vmatprep.subr.mxu0 0.0
        %2166 = vmatpush1.msra.mxu0 %v402
        %2167 = vmatprep.subr.mxu0 0.0
        %2168 = vmatpush1.msra.mxu0 %v403
        %2169 = vmatprep.subr.mxu0 0.0
        %2170 = vmatpush1.msra.mxu0 %v404
        %2171 = vmatprep.subr.mxu0 0.0
        %2172 = vmatpush1.msra.mxu0 %v405
        %2173 = vmatprep.subr.mxu0 0.0
        %2174 = vmatpush1.msra.mxu0 %v406
        %2175 = vmatprep.subr.mxu0 0.0
        %2176 = vmatpush1.msra.mxu0 0.0
        %2177 = vmatprep.subr.mxu0 0.0
        %2178 = vmatpush1.msra.mxu0 0.0
        %2179 = vmatprep.subr.mxu0 0.0
        %2180 = vmatpush1.msra.mxu0 0.0
        %2181 = vmatprep.subr.mxu0 0.0
        %2182 = vmatpush1.msra.mxu0 0.0
        %2183 = vmatprep.subr.mxu0 0.0
        %2184 = vmatpush1.msra.mxu0 0.0
        %2185 = vmatprep.subr.mxu0 0.0
        %2186 = vmatpush1.msra.mxu0 0.0
        %2187 = vmatprep.subr.mxu0 0.0
        %2188 = vmatpush1.msra.mxu0 0.0
        %2189 = vmatprep.subr.mxu0 0.0
        %2190 = vmatpush1.msra.mxu0 0.0
        %2191 = vmatprep.subr.mxu0 0.0
        %2192 = vmatpush1.msra.mxu0 0.0
        %2193 = vmatprep.subr.mxu0 0.0
        %2194 = vmatpush1.msra.mxu0 0.0
        %2195 = vmatprep.subr.mxu0 0.0
        %2196 = vmatpush1.msra.mxu0 0.0
        %2197 = vmatprep.subr.mxu0 0.0
        %2198 = vmatpush1.msra.mxu0 0.0
        %2199 = vmatprep.subr.mxu0 0.0
        %2200 = vmatpush1.msra.mxu0 0.0
        %2201 = vmatprep.subr.mxu0 0.0
        %2202 = vmatpush1.msra.mxu0 0.0
        %2203 = vmatprep.subr.mxu0 0.0
        %2204 = vmatpush1.msra.mxu0 0.0
        %2205 = vmatprep.subr.mxu0 0.0
        %2206 = vmatpush1.msra.mxu0 0.0
        %2207 = vmatprep.mubr.f32.mxu0 0.0
        %2208 = vmatmul.mubr.f32.gmra.mrb[0].mxu0 %v2141
        %v2209 = vpop.f32.mrb[0].mxu0
        %v2210 = vadd.f32 0.0, %v2209
        %v2211 = vpop.f32.mrb[0].mxu0
        %2212 = vdwg.mxu0
        %v2213 = vmul.f32 %v2210, 0.03125
        %v2214 = vadd.f32 %v2213, 1e-05
        %v2215 = vrsqrt.pop %v2214
        %v2217 = vrot.slane %v2215, 1
        %v2218 = vrot.slane %v2215, 2
        %v2219 = vrot.slane %v2215, 3
        %v2220 = vrot.slane %v2215, 4
        %v2221 = vrot.slane %v2215, 5
        %v2222 = vrot.slane %v2215, 6
        %v2223 = vrot.slane %v2215, 7
        %v2232 = vmul.f32 %v2104, %v2215
        %v2233 = vmul.f32 %v2105, %v2217
        %v2234 = vmul.f32 %v2106, %v2218
        %v2235 = vmul.f32 %v2107, %v2219
        %v2236 = vmul.f32 %v2108, %v2220
        %v2237 = vmul.f32 %v2109, %v2221
        %v2238 = vmul.f32 %v2110, %v2222
        %v2239 = vmul.f32 %v2111, %v2223
        %v2240 = vlaneseq
        %v2241 = vshrl.u32 %v2240, 7
        %v2242 = vsub.s32 7, %v2241
        %v2243 = vrot.slane %v348, %v2242
        %v2244 = vmul.f32 %v2232, %v2243
        %v2245 = vmul.f32 %v2233, %v2243
        %v2246 = vmul.f32 %v2234, %v2243
        %v2247 = vmul.f32 %v2235, %v2243
        %v2248 = vmul.f32 %v2236, %v2243
        %v2249 = vmul.f32 %v2237, %v2243
        %v2250 = vmul.f32 %v2238, %v2243
        %v2251 = vmul.f32 %v2239, %v2243
        %v2252 = vlaneseq
        %v2253 = vshrl.u32 %v2252, 7
        %v2254 = vsub.s32 0, %v2253
        %v2255 = vrot.slane %v349, %v2254
        %v2256 = vadd.f32 %v2244, %v2255
        %v2257 = vadd.f32 %v2245, %v2255
        %v2258 = vadd.f32 %v2246, %v2255
        %v2259 = vadd.f32 %v2247, %v2255
        %v2260 = vadd.f32 %v2248, %v2255
        %v2261 = vadd.f32 %v2249, %v2255
        %v2262 = vadd.f32 %v2250, %v2255
        %v2263 = vadd.f32 %v2251, %v2255
        %s2264 = scalar_lea.vmem [#allocation10], 768
        %v2265 = vld [vmem:[%s2264] sm:$0xff]
        %v2266 = vld [vmem:[%s2264 + $0x8] sm:$0xff]
        %v2267 = vld [vmem:[%s2264 + $0x10] sm:$0xff]
        %v2268 = vld [vmem:[%s2264 + $0x18] sm:$0xff]
        %v2269 = vld [vmem:[%s2264 + $0x20] sm:$0xff]
        %v2270 = vld [vmem:[%s2264 + $0x28] sm:$0xff]
        %v2271 = vld [vmem:[%s2264 + $0x30] sm:$0xff]
        %v2272 = vld [vmem:[%s2264 + $0x38] sm:$0xff]
        %v2273 = vld [vmem:[%s2264 + $0x40] sm:$0xff]
        %v2274 = vld [vmem:[%s2264 + $0x48] sm:$0xff]
        %v2275 = vld [vmem:[%s2264 + $0x50] sm:$0xff]
        %v2276 = vld [vmem:[%s2264 + $0x58] sm:$0xff]
        %v2277 = vld [vmem:[%s2264 + $0x60] sm:$0xff]
        %v2278 = vld [vmem:[%s2264 + $0x68] sm:$0xff]
        %v2279 = vld [vmem:[%s2264 + $0x70] sm:$0xff]
        %v2280 = vld [vmem:[%s2264 + $0x78] sm:$0xff]
        %v2281 = vlaneseq
        %v2282 = vshrl.u32 %v2281, 7
        %v2283 = vsub.s32 1, %v2282
        %v2284 = vrot.slane %v349, %v2283
        %v2293 = vrot.slane %v2257, 7
        %v2294 = vsel %vm2002, %v2293, %v2256
        %v2295 = vrot.slane %v2258, 6
        %v2296 = vsel %vm2004, %v2295, %v2294
        %v2297 = vrot.slane %v2259, 5
        %v2298 = vsel %vm2006, %v2297, %v2296
        %v2299 = vrot.slane %v2260, 4
        %v2300 = vsel %vm2008, %v2299, %v2298
        %v2301 = vrot.slane %v2261, 3
        %v2302 = vsel %vm2010, %v2301, %v2300
        %v2303 = vrot.slane %v2262, 2
        %v2304 = vsel %vm2012, %v2303, %v2302
        %v2305 = vrot.slane %v2263, 1
        %v2306 = vsel %vm2014, %v2305, %v2304
        %2308 = vmatprep.subr.mxu0 0.0
        %2309 = vmatpush1.msra.mxu0 %v2265
        %2310 = vmatprep.subr.mxu0 0.0
        %2311 = vmatpush1.msra.mxu0 %v2266
        %2312 = vmatprep.subr.mxu0 0.0
        %2313 = vmatpush1.msra.mxu0 %v2267
        %2314 = vmatprep.subr.mxu0 0.0
        %2315 = vmatpush1.msra.mxu0 %v2268
        %2316 = vmatprep.subr.mxu0 0.0
        %2317 = vmatpush1.msra.mxu0 %v2269
        %2318 = vmatprep.subr.mxu0 0.0
        %2319 = vmatpush1.msra.mxu0 %v2270
        %2320 = vmatprep.subr.mxu0 0.0
        %2321 = vmatpush1.msra.mxu0 %v2271
        %2322 = vmatprep.subr.mxu0 0.0
        %2323 = vmatpush1.msra.mxu0 %v2272
        %2324 = vmatprep.subr.mxu0 0.0
        %2325 = vmatpush1.msra.mxu0 %v2273
        %2326 = vmatprep.subr.mxu0 0.0
        %2327 = vmatpush1.msra.mxu0 %v2274
        %2328 = vmatprep.subr.mxu0 0.0
        %2329 = vmatpush1.msra.mxu0 %v2275
        %2330 = vmatprep.subr.mxu0 0.0
        %2331 = vmatpush1.msra.mxu0 %v2276
        %2332 = vmatprep.subr.mxu0 0.0
        %2333 = vmatpush1.msra.mxu0 %v2277
        %2334 = vmatprep.subr.mxu0 0.0
        %2335 = vmatpush1.msra.mxu0 %v2278
        %2336 = vmatprep.subr.mxu0 0.0
        %2337 = vmatpush1.msra.mxu0 %v2279
        %2338 = vmatprep.subr.mxu0 0.0
        %2339 = vmatpush1.msra.mxu0 %v2280
        %2340 = vmatprep.subr.mxu0 0.0
        %2341 = vmatpush1.msra.mxu0 0.0
        %2342 = vmatprep.subr.mxu0 0.0
        %2343 = vmatpush1.msra.mxu0 0.0
        %2344 = vmatprep.subr.mxu0 0.0
        %2345 = vmatpush1.msra.mxu0 0.0
        %2346 = vmatprep.subr.mxu0 0.0
        %2347 = vmatpush1.msra.mxu0 0.0
        %2348 = vmatprep.subr.mxu0 0.0
        %2349 = vmatpush1.msra.mxu0 0.0
        %2350 = vmatprep.subr.mxu0 0.0
        %2351 = vmatpush1.msra.mxu0 0.0
        %2352 = vmatprep.subr.mxu0 0.0
        %2353 = vmatpush1.msra.mxu0 0.0
        %2354 = vmatprep.subr.mxu0 0.0
        %2355 = vmatpush1.msra.mxu0 0.0
        %2356 = vmatprep.subr.mxu0 0.0
        %2357 = vmatpush1.msra.mxu0 0.0
        %2358 = vmatprep.subr.mxu0 0.0
        %2359 = vmatpush1.msra.mxu0 0.0
        %2360 = vmatprep.subr.mxu0 0.0
        %2361 = vmatpush1.msra.mxu0 0.0
        %2362 = vmatprep.subr.mxu0 0.0
        %2363 = vmatpush1.msra.mxu0 0.0
        %2364 = vmatprep.subr.mxu0 0.0
        %2365 = vmatpush1.msra.mxu0 0.0
        %2366 = vmatprep.subr.mxu0 0.0
        %2367 = vmatpush1.msra.mxu0 0.0
        %2368 = vmatprep.subr.mxu0 0.0
        %2369 = vmatpush1.msra.mxu0 0.0
        %2370 = vmatprep.subr.mxu0 0.0
        %2371 = vmatpush1.msra.mxu0 0.0
        %2372 = vmatprep.mubr.f32.mxu0 0.0
        %2373 = vmatmul.mubr.f32.gmra.mrb[0].mxu0 %v2306
        %v2374 = vpop.f32.mrb[0].mxu0
        %v2375 = vadd.f32 %v2284, %v2374
        %v2376 = vpop.f32.mrb[0].mxu0
        %2377 = vdwg.mxu0
        %vm2378 = vcmp.gt.f32.partialorder %v2375, 0.0
        %v2379 = vmin.f32 %v2375, 0.0
        %v2380 = vmul.f32 %v2379, 1.442695
        %v2381 = vpow.pop %v2380
        %v2382 = vsub.f32 %v2381, 1.0
        %v2383 = vsel %vm2378, %v2375, %v2382
        %s2384 = scalar_lea.vmem [#allocation10], 896
        %v2385 = vld [vmem:[%s2384] sm:$0xff]
        %v2386 = vld [vmem:[%s2384 + $0x8] sm:$0xff]
        %v2387 = vld [vmem:[%s2384 + $0x10] sm:$0xff]
        %v2388 = vld [vmem:[%s2384 + $0x18] sm:$0xff]
        %v2389 = vld [vmem:[%s2384 + $0x20] sm:$0xff]
        %v2390 = vld [vmem:[%s2384 + $0x28] sm:$0xff]
        %v2391 = vld [vmem:[%s2384 + $0x30] sm:$0xff]
        %v2392 = vld [vmem:[%s2384 + $0x38] sm:$0xff]
        %v2393 = vld [vmem:[%s2384 + $0x40] sm:$0xff]
        %v2394 = vld [vmem:[%s2384 + $0x48] sm:$0xff]
        %v2395 = vld [vmem:[%s2384 + $0x50] sm:$0xff]
        %v2396 = vld [vmem:[%s2384 + $0x58] sm:$0xff]
        %v2397 = vld [vmem:[%s2384 + $0x60] sm:$0xff]
        %v2398 = vld [vmem:[%s2384 + $0x68] sm:$0xff]
        %v2399 = vld [vmem:[%s2384 + $0x70] sm:$0xff]
        %v2400 = vld [vmem:[%s2384 + $0x78] sm:$0xff]
        %v2401 = vlaneseq
        %v2402 = vshrl.u32 %v2401, 7
        %v2403 = vsub.s32 2, %v2402
        %v2404 = vrot.slane %v349, %v2403
        %2405 = vmatprep.subr.mxu0 0.0
        %2406 = vmatpush1.msra.mxu0 %v2385
        %2407 = vmatprep.subr.mxu0 0.0
        %2408 = vmatpush1.msra.mxu0 %v2386
        %2409 = vmatprep.subr.mxu0 0.0
        %2410 = vmatpush1.msra.mxu0 %v2387
        %2411 = vmatprep.subr.mxu0 0.0
        %2412 = vmatpush1.msra.mxu0 %v2388
        %2413 = vmatprep.subr.mxu0 0.0
        %2414 = vmatpush1.msra.mxu0 %v2389
        %2415 = vmatprep.subr.mxu0 0.0
        %2416 = vmatpush1.msra.mxu0 %v2390
        %2417 = vmatprep.subr.mxu0 0.0
        %2418 = vmatpush1.msra.mxu0 %v2391
        %2419 = vmatprep.subr.mxu0 0.0
        %2420 = vmatpush1.msra.mxu0 %v2392
        %2421 = vmatprep.subr.mxu0 0.0
        %2422 = vmatpush1.msra.mxu0 %v2393
        %2423 = vmatprep.subr.mxu0 0.0
        %2424 = vmatpush1.msra.mxu0 %v2394
        %2425 = vmatprep.subr.mxu0 0.0
        %2426 = vmatpush1.msra.mxu0 %v2395
        %2427 = vmatprep.subr.mxu0 0.0
        %2428 = vmatpush1.msra.mxu0 %v2396
        %2429 = vmatprep.subr.mxu0 0.0
        %2430 = vmatpush1.msra.mxu0 %v2397
        %2431 = vmatprep.subr.mxu0 0.0
        %2432 = vmatpush1.msra.mxu0 %v2398
        %2433 = vmatprep.subr.mxu0 0.0
        %2434 = vmatpush1.msra.mxu0 %v2399
        %2435 = vmatprep.subr.mxu0 0.0
        %2436 = vmatpush1.msra.mxu0 %v2400
        %2437 = vmatprep.subr.mxu0 0.0
        %2438 = vmatpush1.msra.mxu0 0.0
        %2439 = vmatprep.subr.mxu0 0.0
        %2440 = vmatpush1.msra.mxu0 0.0
        %2441 = vmatprep.subr.mxu0 0.0
        %2442 = vmatpush1.msra.mxu0 0.0
        %2443 = vmatprep.subr.mxu0 0.0
        %2444 = vmatpush1.msra.mxu0 0.0
        %2445 = vmatprep.subr.mxu0 0.0
        %2446 = vmatpush1.msra.mxu0 0.0
        %2447 = vmatprep.subr.mxu0 0.0
        %2448 = vmatpush1.msra.mxu0 0.0
        %2449 = vmatprep.subr.mxu0 0.0
        %2450 = vmatpush1.msra.mxu0 0.0
        %2451 = vmatprep.subr.mxu0 0.0
        %2452 = vmatpush1.msra.mxu0 0.0
        %2453 = vmatprep.subr.mxu0 0.0
        %2454 = vmatpush1.msra.mxu0 0.0
        %2455 = vmatprep.subr.mxu0 0.0
        %2456 = vmatpush1.msra.mxu0 0.0
        %2457 = vmatprep.subr.mxu0 0.0
        %2458 = vmatpush1.msra.mxu0 0.0
        %2459 = vmatprep.subr.mxu0 0.0
        %2460 = vmatpush1.msra.mxu0 0.0
        %2461 = vmatprep.subr.mxu0 0.0
        %2462 = vmatpush1.msra.mxu0 0.0
        %2463 = vmatprep.subr.mxu0 0.0
        %2464 = vmatpush1.msra.mxu0 0.0
        %2465 = vmatprep.subr.mxu0 0.0
        %2466 = vmatpush1.msra.mxu0 0.0
        %2467 = vmatprep.subr.mxu0 0.0
        %2468 = vmatpush1.msra.mxu0 0.0
        %2469 = vmatprep.mubr.f32.mxu0 0.0
        %2470 = vmatmul.mubr.f32.gmra.mrb[0].mxu0 %v2383
        %v2471 = vpop.f32.mrb[0].mxu0
        %v2472 = vadd.f32 %v2404, %v2471
        %v2473 = vpop.f32.mrb[0].mxu0
        %2474 = vdwg.mxu0
        %s2475 = scalar_lea.vmem [#allocation10], 1024
        %v2476 = vld [vmem:[%s2475] sm:$0xff]
        %v2477 = vld [vmem:[%s2475 + $0x8] sm:$0xff]
        %v2478 = vld [vmem:[%s2475 + $0x10] sm:$0xff]
        %v2479 = vld [vmem:[%s2475 + $0x18] sm:$0xff]
        %v2480 = vld [vmem:[%s2475 + $0x20] sm:$0xff]
        %v2481 = vld [vmem:[%s2475 + $0x28] sm:$0xff]
        %v2482 = vld [vmem:[%s2475 + $0x30] sm:$0xff]
        %v2483 = vld [vmem:[%s2475 + $0x38] sm:$0xff]
        %v2484 = vld [vmem:[%s2475 + $0x40] sm:$0xff]
        %v2485 = vld [vmem:[%s2475 + $0x48] sm:$0xff]
        %v2486 = vld [vmem:[%s2475 + $0x50] sm:$0xff]
        %v2487 = vld [vmem:[%s2475 + $0x58] sm:$0xff]
        %v2488 = vld [vmem:[%s2475 + $0x60] sm:$0xff]
        %v2489 = vld [vmem:[%s2475 + $0x68] sm:$0xff]
        %v2490 = vld [vmem:[%s2475 + $0x70] sm:$0xff]
        %v2491 = vld [vmem:[%s2475 + $0x78] sm:$0xff]
        %v2492 = vlaneseq
        %v2493 = vshrl.u32 %v2492, 7
        %v2494 = vsub.s32 3, %v2493
        %v2495 = vrot.slane %v349, %v2494
        %2496 = vmatprep.subr.mxu0 0.0
        %2497 = vmatpush1.msra.mxu0 %v2476
        %2498 = vmatprep.subr.mxu0 0.0
        %2499 = vmatpush1.msra.mxu0 %v2477
        %2500 = vmatprep.subr.mxu0 0.0
        %2501 = vmatpush1.msra.mxu0 %v2478
        %2502 = vmatprep.subr.mxu0 0.0
        %2503 = vmatpush1.msra.mxu0 %v2479
        %2504 = vmatprep.subr.mxu0 0.0
        %2505 = vmatpush1.msra.mxu0 %v2480
        %2506 = vmatprep.subr.mxu0 0.0
        %2507 = vmatpush1.msra.mxu0 %v2481
        %2508 = vmatprep.subr.mxu0 0.0
        %2509 = vmatpush1.msra.mxu0 %v2482
        %2510 = vmatprep.subr.mxu0 0.0
        %2511 = vmatpush1.msra.mxu0 %v2483
        %2512 = vmatprep.subr.mxu0 0.0
        %2513 = vmatpush1.msra.mxu0 %v2484
        %2514 = vmatprep.subr.mxu0 0.0
        %2515 = vmatpush1.msra.mxu0 %v2485
        %2516 = vmatprep.subr.mxu0 0.0
        %2517 = vmatpush1.msra.mxu0 %v2486
        %2518 = vmatprep.subr.mxu0 0.0
        %2519 = vmatpush1.msra.mxu0 %v2487
        %2520 = vmatprep.subr.mxu0 0.0
        %2521 = vmatpush1.msra.mxu0 %v2488
        %2522 = vmatprep.subr.mxu0 0.0
        %2523 = vmatpush1.msra.mxu0 %v2489
        %2524 = vmatprep.subr.mxu0 0.0
        %2525 = vmatpush1.msra.mxu0 %v2490
        %2526 = vmatprep.subr.mxu0 0.0
        %2527 = vmatpush1.msra.mxu0 %v2491
        %2528 = vmatprep.subr.mxu0 0.0
        %2529 = vmatpush1.msra.mxu0 0.0
        %2530 = vmatprep.subr.mxu0 0.0
        %2531 = vmatpush1.msra.mxu0 0.0
        %2532 = vmatprep.subr.mxu0 0.0
        %2533 = vmatpush1.msra.mxu0 0.0
        %2534 = vmatprep.subr.mxu0 0.0
        %2535 = vmatpush1.msra.mxu0 0.0
        %2536 = vmatprep.subr.mxu0 0.0
        %2537 = vmatpush1.msra.mxu0 0.0
        %2538 = vmatprep.subr.mxu0 0.0
        %2539 = vmatpush1.msra.mxu0 0.0
        %2540 = vmatprep.subr.mxu0 0.0
        %2541 = vmatpush1.msra.mxu0 0.0
        %2542 = vmatprep.subr.mxu0 0.0
        %2543 = vmatpush1.msra.mxu0 0.0
        %2544 = vmatprep.subr.mxu0 0.0
        %2545 = vmatpush1.msra.mxu0 0.0
        %2546 = vmatprep.subr.mxu0 0.0
        %2547 = vmatpush1.msra.mxu0 0.0
        %2548 = vmatprep.subr.mxu0 0.0
        %2549 = vmatpush1.msra.mxu0 0.0
        %2550 = vmatprep.subr.mxu0 0.0
        %2551 = vmatpush1.msra.mxu0 0.0
        %2552 = vmatprep.subr.mxu0 0.0
        %2553 = vmatpush1.msra.mxu0 0.0
        %2554 = vmatprep.subr.mxu0 0.0
        %2555 = vmatpush1.msra.mxu0 0.0
        %2556 = vmatprep.subr.mxu0 0.0
        %2557 = vmatpush1.msra.mxu0 0.0
        %2558 = vmatprep.subr.mxu0 0.0
        %2559 = vmatpush1.msra.mxu0 0.0
        %2560 = vmatprep.mubr.f32.mxu0 0.0
        %2561 = vmatmul.mubr.f32.gmra.mrb[0].mxu0 %v2383
        %v2562 = vpop.f32.mrb[0].mxu0
        %v2563 = vadd.f32 %v2495, %v2562
        %v2564 = vpop.f32.mrb[0].mxu0
        %2565 = vdwg.mxu0
        %v2566 = vxor.u32 %v2563, 2147483648
        %v2567 = vmul.f32 %v2566, 1.442695
        %v2568 = vpow.pop %v2567
        %v2569 = vadd.f32 %v2568, 1.0
        %v2570 = vrcp.pop %v2569
        %v2571 = vmul.f32 1.0, %v2570
        %v2572 = vmul.f32 %v2571, %v2472
        %v2573 = vadd.f32 %v1372, %v2572
        %2574 = vst [vmem:[%s345] sm:$0xff] %v2573
        %s2575 = sand.u32 %s154, 1
        %s2576 = scalar_lea.sflag [#allocation4], %s2575
        %s2577 = sand.u32 %s154, 1
        %s2578 = smul.addr %s2577, 8
        %s2579 = scalar_lea.vmem [#allocation11], %s2578
        // Predicated region
        $region61: #{tpu_custom_call.1} parent=39 // pred_check
          %p2580 = pneg %p164
        $region62: #{tpu_custom_call.1} parent=39 // pred_check_branch
          %2582 = sbr.rel (%p2580) target = $region64
        $region63: #{tpu_custom_call.1} parent=39 // pred_region
          %s2584 = ssub.s32 128, 128
          %2585 = vsyncadd %s2576, %s2584
          %s2586 = smul.addr %s26, 128
          %s2587 = scalar_lea.hbm %s5, %s2586
          %s2589 = sshll.u32 %s2579, 4
          %s2590 = int_to_ptr.vmem [resolvable:$true] %s2589
          %2592 = dma.vmem_to_hbm [thread:$0]  %s2590, 128, %s2587, %s2576
        $region64: #{tpu_custom_call.1} parent=39 // pred_fallthru
          _
      $region40: #{tpu_custom_call.1} parent=5 // pred_fallthru
        _
      %p2593 = scmp.le.s32.totalorder 2, %s21
      // Predicated region
      $region65: #{tpu_custom_call.1} parent=5 // pred_check
        %p2594 = pneg %p2593
      $region66: #{tpu_custom_call.1} parent=5 // pred_check_branch
        %2596 = sbr.rel (%p2594) target = $region68
      $region67: #{tpu_custom_call.1} parent=5 // pred_region
        %s2597 = ssub.s32 %s21, 2
        // Predicated region
        $region69: #{tpu_custom_call.1} parent=67 // pred_check
          %p2598 = pneg %p170
        $region70: #{tpu_custom_call.1} parent=67 // pred_check_branch
          %2600 = sbr.rel (%p2598) target = $region72
        $region71: #{tpu_custom_call.1} parent=67 // pred_region
          %s2601 = sand.u32 %s155, 1
          %s2602 = scalar_lea.sflag [#allocation4], %s2601
          %s2603 = sand.u32 %s155, 1
          %s2604 = smul.addr %s2603, 8
          %s2605 = scalar_lea.vmem [#allocation11], %s2604
          %2606 = dma.done %s2602, 128
        $region72: #{tpu_custom_call.1} parent=67 // pred_fallthru
          _
      $region68: #{tpu_custom_call.1} parent=5 // pred_fallthru
        _
    $region6: #{tpu_custom_call.1} parent=1 // loop_footer
      %s25 = sadd.s32 1, %s21
    $region7: #{tpu_custom_call.1} parent=1 // loop_footer_branch
      %20 = sbr.rel target = $region3
    $region8: #{tpu_custom_call.1} parent=1 // loop_exit
      _
    %2607 = vsyncpa [#allocation3], 1
    %s2608 = scalar_lea.sflag [#allocation3], 1
    %2609 = vsyncpa %s2608, 1
    %2610 = vsyncpa [#allocation6], 1
    %s2611 = scalar_lea.sflag [#allocation6], 1
    %2612 = vsyncpa %s2611, 1
    %2613 = vsyncpa [#allocation9], 1
    %2614 = vsyncpa [#allocation4], 1
    %s2615 = scalar_lea.sflag [#allocation4], 1
    %2616 = vsyncpa %s2615, 1

</llo_original>
